<compile_context>
chip_gen: v7x
topology: tpu7x:2x2x1
jax: 0.10.0
libtpu: 0.0.40
codegen_flags: <defaults>
</compile_context>

<pallas_src>
import functools
import math

import numpy as np
import jax
import jax.numpy as jnp
from jax import lax
from jax.experimental import pallas as pl
from jax.experimental.pallas import tpu as pltpu


# --------------------------------------------------------------------------
# helpers
# --------------------------------------------------------------------------
def _round_up(v, m):
    return ((v + m - 1) // m) * m


def _out_dim(size, k, s, p, d):
    return (size + 2 * p - d * (k - 1) - 1) // s + 1


def _triple(v):
    return (v, v, v) if isinstance(v, int) else tuple(v)


def _vmem_capacity_bytes():
    """Physical VMEM of the current generation (trace-time query)."""
    try:
        info = pltpu.get_tpu_info()
        cap = getattr(info, "vmem_capacity_bytes", None)
        if cap:
            return int(cap)
    except Exception:
        pass
    return 64 * 1024 * 1024  # conservative fallback == v7x per-TC VMEM


# --------------------------------------------------------------------------
# Pallas kernel: out[m, l] = sum_k cols[l, k] * w[k, m] + b[m]
# grid = (N, groups, L tiles, K tiles); K is the last ("arbitrary") reduction
# axis, accumulated into a float32 VMEM scratch.  Output blocks are emitted
# transposed (Mg, tl) so stores / output DMA are lane-dense.
# --------------------------------------------------------------------------
def _gemm_bias_kernel(w_ref, b_ref, x_ref, o_ref, acc_ref):
    # w_ref: (tk, Mg)  b_ref: (Mg, 1)  x_ref: (tl, tk)
    # o_ref: (Mg, tl)  acc_ref: (tl, Mg)
    @pl.when(pl.program_id(3) == 0)
    def _init():
        acc_ref[...] = jnp.zeros_like(acc_ref)

    acc_ref[...] += jnp.dot(x_ref[...], w_ref[...],
                            preferred_element_type=jnp.float32)

    @pl.when(pl.program_id(3) == pl.num_programs(3) - 1)
    def _finalize():
        # One (tl, Mg) -> (Mg, tl) transpose per output tile (XLU slot is idle
        # in this GEMM) makes the stores unmasked and the output HBM rows
        # tl*4 bytes long instead of Mg*4, and removes the host-side
        # jnp.transpose over the whole output tensor.
        # NOTE: padded L rows also get bias written; they are sliced off by
        # the caller and never consumed.
        o_ref[...] = (jnp.transpose(acc_ref[...], (1, 0)) +
                      b_ref[...]).astype(o_ref.dtype)


def _choose_tiles(L, Kg, Mg, num_parallel_outer):
    """Pick (tl, tk, Lp, Kp, vmem_limit) per generation.

    Budget / limit scale with physical VMEM (v5e/v6e 128 MiB vs v7x 64 MiB);
    tiles are the biggest lane tiles that fit the budget with double-buffered
    BlockSpec pipelining.
    """
    cap = _vmem_capacity_bytes()
    budget = int(cap * 0.45)        # ~20-28 MiB on v7x, ~57 MiB on v5e/v6e
    vmem_limit = int(cap * 0.70)    # scoped VMEM limit handed to Mosaic

    big = budget >= 40 * 1024 * 1024

    # K (reduction) axis: keep it un-split (tk == full K) whenever it fits —
    # a block dim equal to the full array dim is layout-legal and the HBM
    # transfer of a (tl, Kg) block is fully contiguous, so deliberately NOT
    # zero-padding Kg to a 128 multiple here: that would cost an extra full
    # read+write pass over cols (the GEMM is HBM-bound), which outweighs the
    # masked lane-tail loads.  Only very large K gets split (and then padded).
    k_full_cap = 4096 if big else 2048
    if Kg <= k_full_cap:
        tk, Kp = Kg, Kg
    else:
        tk = 512
        Kp = _round_up(Kg, tk)

    def tile_bytes(rows, cols_, itemsize):
        # VMEM layout pads second-minor to 8 sublanes, minor to 128 lanes.
        return (_round_up(max(rows, 1), 8) *
                _round_up(max(cols_, 1), 128) * itemsize)

    tl = min(4096 if big else 2048, _round_up(max(L, 1), 128))
    # v7x megacore: 2 TensorCores share the parallel grid axes.  If N*G == 1,
    # cap tl so the L axis yields at least two parallel tiles.
    if num_parallel_outer == 1 and L > 128:
        tl = min(tl, max(128, _round_up(-(-L // 2), 128)))
    while tl > 128:
        need = (2 * tile_bytes(tl, tk, 2)      # cols blocks (bf16, double-buf)
                + 2 * tile_bytes(tk, Mg, 2)    # weight blocks (bf16)
                + 2 * tile_bytes(Mg, 1, 4)     # bias blocks
                + 2 * tile_bytes(Mg, tl, 4)    # output blocks (f32, transposed)
                + tile_bytes(tl, Mg, 4))       # accumulator scratch
        if need <= budget:
            break
        tl -= 128
    Lp = _round_up(L, tl)
    return tl, tk, Lp, Kp, vmem_limit


def _deform_gemm_bias(cols, w, b, tl, tk, vmem_limit):
    """cols [N, G, Lp, Kp] bf16, w [G, Kp, Mg] bf16, b [G, Mg, 1] f32
       -> out [N, G, Mg, Lp] f32 (lane-dense, already channel-major)."""
    N, G, Lp, Kp = cols.shape
    Mg = w.shape[-1]
    grid = (N, G, Lp // tl, Kp // tk)
    return pl.pallas_call(
        _gemm_bias_kernel,
        out_shape=jax.ShapeDtypeStruct((N, G, Mg, Lp), jnp.float32),
        grid=grid,
        in_specs=[
            pl.BlockSpec((None, tk, Mg), lambda n, g, l, k: (g, k, 0)),
            pl.BlockSpec((None, Mg, 1), lambda n, g, l, k: (g, 0, 0)),
            # TODO(synk): if DMA stalls at K-tile switches show up in traces,
            # add pipeline_mode=pl.Buffered(3) on this cols spec only.
            pl.BlockSpec((None, None, tl, tk), lambda n, g, l, k: (n, g, l, k)),
        ],
        out_specs=pl.BlockSpec((None, None, Mg, tl),
                               lambda n, g, l, k: (n, g, 0, l)),
        scratch_shapes=[pltpu.VMEM((tl, Mg), jnp.float32)],
        compiler_params=pltpu.CompilerParams(
            dimension_semantics=("parallel", "parallel", "parallel",
                                 "arbitrary"),
            vmem_limit_bytes=vmem_limit),
    )(w, b, cols)


# --------------------------------------------------------------------------
# offset construction from `temp` (replicates DeformConv_d.forward)
# --------------------------------------------------------------------------
def _build_offset(temp, dimension, deformable_groups, kernel_size):
    """Packed offsets: per deformable group, per kernel tap (row-major
    kd,kh,kw), the 3 components (t, h, w) — i.e. channels (i*3, i*3+1, i*3+2)
    exactly as the reference forward writes them (no hard-coded 81 needed)."""
    Kd, Kh, Kw = kernel_size
    n_pts = deformable_groups * Kd * Kh * Kw
    N, c, t, h, w = temp.shape
    has_t = "T" in dimension
    has_h = "H" in dimension
    has_w = "W" in dimension
    length = len(dimension)

    if length == 3:
        # TODO(synk): the reference forward leaves `offset` undefined for a
        # 3-letter dimension string (it would raise); accept `temp` as the
        # already-packed offset tensor in that case.
        if c != 3 * n_pts:
            raise ValueError(
                f"dimension='THW' expects temp with {3 * n_pts} channels "
                f"(packed offsets); got {c}")
        return temp

    zeros = jnp.zeros((N, n_pts, t, h, w), temp.dtype)
    if length == 2:
        assert c == 2 * n_pts
        even, odd = temp[:, 0::2], temp[:, 1::2]
        if not has_t:
            off_t, off_h, off_w = zeros, even, odd
        elif not has_h:
            off_t, off_h, off_w = even, zeros, odd
        else:  # not has_w
            off_t, off_h, off_w = even, odd, zeros
    elif length == 1:
        assert c == n_pts
        if has_t:
            off_t, off_h, off_w = temp, zeros, zeros
        elif has_h:
            off_t, off_h, off_w = zeros, temp, zeros
        else:
            off_t, off_h, off_w = zeros, zeros, temp
    else:
        raise ValueError(f"unsupported dimension string: {dimension!r}")

    off = jnp.stack([off_t, off_h, off_w], axis=2)  # [N, n_pts, 3, t, h, w]
    return off.reshape(N, n_pts * 3, t, h, w)


# --------------------------------------------------------------------------
# deformable trilinear im2col (gather glue — plain JAX, see TODO in header)
# --------------------------------------------------------------------------
def _deform_im2col(x, offset, kernel_size, stride, padding, dilation,
                   deformable_groups, groups, Lp):
    """Returns cols [N, G, Lp, K3*Cin_g] (bfloat16) with the K axis ordered
    (kd, kh, kw, cin_g) and the flattened-spatial axis already padded to Lp."""
    N, Cin, D, H, W = x.shape
    Kd, Kh, Kw = kernel_size
    sd, sh, sw = stride
    pd_, ph_, pw_ = padding
    dd, dh, dw = dilation
    K3 = Kd * Kh * Kw
    DG = deformable_groups
    Cg = Cin // DG
    G = groups
    Cin_g = Cin // G

    Dout = _out_dim(D, Kd, sd, pd_, dd)
    Hout = _out_dim(H, Kh, sh, ph_, dh)
    Wout = _out_dim(W, Kw, sw, pw_, dw)
    L = Dout * Hout * Wout
    f32 = jnp.float32

    # ---- sampling positions (L-major, K3-minor, matching the cols layout) --
    off = offset.reshape(N, DG, K3, 3, L).astype(f32)
    off_t = jnp.swapaxes(off[:, :, :, 0, :], -1, -2)   # [N, DG, L, K3]
    off_h = jnp.swapaxes(off[:, :, :, 1, :], -1, -2)
    off_w = jnp.swapaxes(off[:, :, :, 2, :], -1, -2)

    od = jnp.arange(Dout, dtype=f32) * sd - pd_
    oh = jnp.arange(Hout, dtype=f32) * sh - ph_
    ow = jnp.arange(Wout, dtype=f32) * sw - pw_
    bd = jnp.broadcast_to(od[:, None, None], (Dout, Hout, Wout)).reshape(L)
    bh = jnp.broadcast_to(oh[None, :, None], (Dout, Hout, Wout)).reshape(L)
    bw = jnp.broadcast_to(ow[None, None, :], (Dout, Hout, Wout)).reshape(L)

    kd_g, kh_g, kw_g = jnp.meshgrid(jnp.arange(Kd, dtype=f32) * dd,
                                    jnp.arange(Kh, dtype=f32) * dh,
                                    jnp.arange(Kw, dtype=f32) * dw,
                                    indexing="ij")
    kd_f = kd_g.reshape(K3)
    kh_f = kh_g.reshape(K3)
    kw_f = kw_g.reshape(K3)

    pd = off_t + bd[None, None, :, None] + kd_f[None, None, None, :]
    ph = off_h + bh[None, None, :, None] + kh_f[None, None, None, :]
    pw = off_w + bw[None, None, :, None] + kw_f[None, None, None, :]

    # Pad the flattened-spatial axis up front so the GEMM needs no extra
    # jnp.pad pass over the (much larger) cols tensor.
    if Lp != L:
        padL = ((0, 0), (0, 0), (0, Lp - L), (0, 0))
        pd = jnp.pad(pd, padL)
        ph = jnp.pad(ph, padL)
        pw = jnp.pad(pw, padL)

    # Zero-border trick: pad x by one voxel per side and shift positions by +1;
    # clamping then reproduces DCN's "out-of-bounds corners contribute zero"
    # rule with no per-corner validity masks.
    Dp2, Hp2, Wp2 = D + 2, H + 2, W + 2
    pd = jnp.clip(pd + 1.0, 0.0, float(D + 1))
    ph = jnp.clip(ph + 1.0, 0.0, float(H + 1))
    pw = jnp.clip(pw + 1.0, 0.0, float(W + 1))
    d0 = jnp.clip(jnp.floor(pd), 0.0, float(D)).astype(jnp.int32)
    h0 = jnp.clip(jnp.floor(ph), 0.0, float(H)).astype(jnp.int32)
    w0 = jnp.clip(jnp.floor(pw), 0.0, float(W)).astype(jnp.int32)
    fd = (pd - d0.astype(f32)).reshape(N, DG, Lp * K3)
    fh = (ph - h0.astype(f32)).reshape(N, DG, Lp * K3)
    fw = (pw - w0.astype(f32)).reshape(N, DG, Lp * K3)
    base = ((d0 * Hp2 + h0) * Wp2 + w0).reshape(N, DG, Lp * K3)

    # Channel-minor layout so each gather fetches a contiguous Cg vector.
    xp = jnp.pad(x, ((0, 0), (0, 0), (1, 1), (1, 1), (1, 1)))
    x_cm = jnp.swapaxes(xp.reshape(N, DG, Cg, Dp2 * Hp2 * Wp2), -1, -2)
    x_cm = x_cm.astype(jnp.bfloat16)                     # [N, DG, Sp, Cg]

    # TODO(synk): the data-dependent trilinear gather itself stays in plain JAX
    # (vmapped jnp.take) — TPU Pallas has no clean dynamic-gather primitive, so
    # fusing it with the GEMM pipeline is deferred.
    gather_rows = jax.vmap(jax.vmap(
        lambda mat, idx: jnp.take(mat, idx, axis=0, mode="clip")))

    # Fused 8-corner trilinear weighted sum: gathered values stay bf16 (halves
    # the gather-stage HBM bytes vs an f32 upcast); weights / accumulator f32.
    acc = None
    for a in (0, 1):
        wa = fd if a else (1.0 - fd)
        for b in (0, 1):
            wb = fh if b else (1.0 - fh)
            for c in (0, 1):
                wc = fw if c else (1.0 - fw)
                idx = base + (a * Hp2 * Wp2 + b * Wp2 + c)
                vals = gather_rows(x_cm, idx)            # [N, DG, Lp*K3, Cg] bf16
                term = vals * (wa * wb * wc)[..., None]  # promotes to f32
                acc = term if acc is None else acc + term

    cols = acc.astype(jnp.bfloat16).reshape(N, DG, Lp, K3, Cg)
    # [N, DG, Lp, K3, Cg] -> [N, G, Lp, K3*Cin_g]; when DG == G == 1 the
    # moveaxis calls only shuffle size-1 axes (no data movement).
    cols = jnp.moveaxis(cols, 1, 3).reshape(N, Lp, K3, G, Cin_g)
    cols = jnp.moveaxis(cols, 3, 1).reshape(N, G, Lp, K3 * Cin_g)
    return cols, (Dout, Hout, Wout)


# --------------------------------------------------------------------------
# forward
# --------------------------------------------------------------------------
@functools.partial(jax.jit, static_argnames=(
    "kernel_size", "stride", "padding", "dilation", "groups",
    "deformable_groups", "dimension"))
def deform_conv3d_forward(x, temp, weight, bias, *, kernel_size, stride,
                          padding, dilation, groups, deformable_groups,
                          dimension):
    N, Cin, D, H, W = x.shape
    Kd, Kh, Kw = kernel_size
    K3 = Kd * Kh * Kw
    G = groups
    Cout = weight.shape[0]
    Mg = Cout // G
    Cin_g = Cin // G
    Kg = K3 * Cin_g

    Dout = _out_dim(D, Kd, stride[0], padding[0], dilation[0])
    Hout = _out_dim(H, Kh, stride[1], padding[1], dilation[1])
    Wout = _out_dim(W, Kw, stride[2], padding[2], dilation[2])
    L = Dout * Hout * Wout

    offset = _build_offset(temp, dimension, deformable_groups, kernel_size)

    tl, tk, Lp, Kp, vmem_limit = _choose_tiles(L, Kg, Mg, N * G)

    cols, _ = _deform_im2col(x, offset, kernel_size, stride, padding, dilation,
                             deformable_groups, G, Lp)   # [N, G, Lp, Kg] bf16

    # weight -> [G, Kg, Mg] with the K axis ordered (kd, kh, kw, cin_g).
    w = weight.reshape(G, Mg, Cin_g, K3)
    w = jnp.transpose(w, (0, 3, 2, 1)).reshape(G, Kg, Mg).astype(jnp.bfloat16)
    b = bias.reshape(G, Mg, 1).astype(jnp.float32)

    if Kp != Kg:
        # Only reached for very large Cin_g * K3 (K axis split into 512-wide
        # tiles); zero padding keeps the reduction exact.
        cols = jnp.pad(cols, ((0, 0), (0, 0), (0, 0), (0, Kp - Kg)))
        w = jnp.pad(w, ((0, 0), (0, Kp - Kg), (0, 0)))

    # [N, G, Mg, Lp] f32, already channel-major -> no host-side transpose.
    out = _deform_gemm_bias(cols, w, b, tl, tk, vmem_limit)
    out = out[:, :, :, :L].reshape(N, Cout, Dout, Hout, Wout)
    return out


class DeformConvD:
    """Pallas/JAX port of DeformConv_d (forward pass only)."""

    def __init__(self, in_channels, out_channels, kernel_size, stride, padding,
                 dimension="HW", dilation=1, groups=1, deformable_groups=1,
                 im2col_step=64, bias=True, key=None):
        if in_channels % groups != 0:
            raise ValueError("in_channels must be divisible by groups")
        if out_channels % groups != 0:
            raise ValueError("out_channels must be divisible by groups")
        self.in_channels = in_channels
        self.out_channels = out_channels
        self.kernel_size = _triple(kernel_size)
        self.stride = _triple(stride)
        self.padding = _triple(padding)
        self.dilation = _triple(dilation)
        self.dimension = dimension
        self.groups = groups
        self.deformable_groups = deformable_groups
        self.im2col_step = im2col_step       # CUDA batching knob; unused here
        self.use_bias = bias                 # reference always adds the bias

        Kd, Kh, Kw = self.kernel_size
        fan_in = (in_channels // groups) * Kd * Kh * Kw
        bound = 1.0 / math.sqrt(fan_in)      # kaiming_uniform_(a=sqrt(5))
        if key is None:
            key = jax.random.PRNGKey(0)
        k_w, k_b = jax.random.split(key)
        self.weight = jax.random.uniform(
            k_w, (out_channels, in_channels // groups, Kd, Kh, Kw),
            minval=-bound, maxval=bound, dtype=jnp.float32)
        self.bias = jax.random.uniform(
            k_b, (out_channels,), minval=-bound, maxval=bound,
            dtype=jnp.float32)

    def __call__(self, x, temp):
        return deform_conv3d_forward(
            x, temp, self.weight, self.bias,
            kernel_size=self.kernel_size, stride=self.stride,
            padding=self.padding, dilation=self.dilation, groups=self.groups,
            deformable_groups=self.deformable_groups, dimension=self.dimension)


if __name__ == "__main__":
    key = jax.random.PRNGKey(0)
    k_x, k_t, k_p = jax.random.split(key, 3)

    N, Cin, D, H, W = 2, 4, 8, 8, 8
    Cout = 8
    mod = DeformConvD(Cin, Cout, kernel_size=3, stride=1, padding=1,
                      dimension="HW", dilation=1, groups=1,
                      deformable_groups=1, key=k_p)

    x = jax.random.normal(k_x, (N, Cin, D, H, W), dtype=jnp.float32)
    K3 = 27
    # dimension="HW": temp carries 2 offset components per sampling point.
    temp = 1.5 * jax.random.normal(k_t, (N, 2 * K3, D, H, W),
                                   dtype=jnp.float32)

    out = jax.block_until_ready(mod(x, temp))
    assert out.shape == (N, Cout, D, H, W)
    assert bool(jnp.all(jnp.isfinite(out)))

    # Sanity check: zero offsets ==> ordinary dense 3-D convolution.
    out0 = jax.block_until_ready(mod(x, jnp.zeros_like(temp)))
    ref = lax.conv_general_dilated(
        x, mod.weight, window_strides=mod.stride,
        padding=[(p, p) for p in mod.padding], rhs_dilation=mod.dilation,
        dimension_numbers=("NCDHW", "OIDHW", "NCDHW"),
        feature_group_count=mod.groups,
        precision=lax.Precision.HIGHEST) + mod.bias[None, :, None, None, None]
    np.testing.assert_allclose(np.asarray(out0), np.asarray(ref),
                               atol=6e-2, rtol=6e-2)

    print("KERNEL_OK")
</pallas_src>

<mosaic_0001>
module attributes {stable_mosaic.version = 11 : i64} {
  func.func @_gemm_bias_kernel(%arg0: i32, %arg1: i32, %arg2: i32, %arg3: i32, %arg4: memref<1x108x8xbf16, #tpu.memory_space<vmem>>, %arg5: memref<1x8x1xf32, #tpu.memory_space<vmem>>, %arg6: memref<1x1x512x108xbf16, #tpu.memory_space<vmem>>, %arg7: memref<1x1x8x512xf32, #tpu.memory_space<vmem>>, %arg8: memref<512x8xf32, #tpu.memory_space<vmem>>) attributes {dimension_semantics = [#tpu.dimension_semantics<parallel>, #tpu.dimension_semantics<parallel>, #tpu.dimension_semantics<parallel>, #tpu.dimension_semantics<arbitrary>], iteration_bounds = array<i64: 2, 1, 1, 1>, scalar_prefetch = 0 : i64, scratch_operands = 1 : i64, tpu.core_type = #tpu.core_type<tc>, window_params = [{transform_indices = @transform_0, window_bounds = array<i64: 1, 108, 8>}, {transform_indices = @transform_1, window_bounds = array<i64: 1, 8, 1>}, {transform_indices = @transform_2, window_bounds = array<i64: 1, 1, 512, 108>}, {transform_indices = @transform_3, window_bounds = array<i64: 1, 1, 8, 512>}]} {
    %c0_i32 = arith.constant 0 : i32
    %0 = arith.cmpi eq, %arg3, %c0_i32 : i32
    %1 = arith.extui %0 : i1 to i32
    %c0_i32_0 = arith.constant 0 : i32
    %2 = arith.cmpi ne, %1, %c0_i32_0 : i32
    scf.if %2 {
      %cst_13 = arith.constant 0.000000e+00 : f32
      %14 = vector.broadcast %cst_13 : f32 to vector<512x8xf32>
      %c0_14 = arith.constant 0 : index
      %c0_15 = arith.constant 0 : index
      %15 = vector.load %arg8[%c0_14, %c0_15] : memref<512x8xf32, #tpu.memory_space<vmem>>, vector<512x8xf32>
      tpu.vector_store %arg8[%c0_14, %c0_15], %14 {strides = array<i32>} : memref<512x8xf32, #tpu.memory_space<vmem>>, vector<512x8xf32>,
    } else {
    }
    %c0 = arith.constant 0 : index
    %c0_1 = arith.constant 0 : index
    %3 = vector.load %arg8[%c0, %c0_1] : memref<512x8xf32, #tpu.memory_space<vmem>>, vector<512x8xf32>
    %c0_2 = arith.constant 0 : index
    %c0_3 = arith.constant 0 : index
    %c0_4 = arith.constant 0 : index
    %c0_5 = arith.constant 0 : index
    %4 = vector.load %arg6[%c0_2, %c0_3, %c0_4, %c0_5] : memref<1x1x512x108xbf16, #tpu.memory_space<vmem>>, vector<1x1x512x108xbf16>
    %5 = vector.shape_cast %4 : vector<1x1x512x108xbf16> to vector<512x108xbf16>
    %c0_6 = arith.constant 0 : index
    %c0_7 = arith.constant 0 : index
    %c0_8 = arith.constant 0 : index
    %6 = vector.load %arg4[%c0_6, %c0_7, %c0_8] : memref<1x108x8xbf16, #tpu.memory_space<vmem>>, vector<1x108x8xbf16>
    %7 = vector.shape_cast %6 : vector<1x108x8xbf16> to vector<108x8xbf16>
    %cst = arith.constant dense<0.000000e+00> : vector<512x8xf32>
    %8 = tpu.matmul %5, %7, %cst {dimension_numbers = #tpu.dot_dimension_numbers<[1], [0], [0], [1], [0, 0, 1, 1], [], []>} : vector<512x108xbf16>, vector<108x8xbf16>, vector<512x8xf32> -> vector<512x8xf32>
    %9 = arith.addf %3, %8 : vector<512x8xf32>
    %c0_9 = arith.constant 0 : index
    %c0_10 = arith.constant 0 : index
    %10 = vector.load %arg8[%c0_9, %c0_10] : memref<512x8xf32, #tpu.memory_space<vmem>>, vector<512x8xf32>
    tpu.vector_store %arg8[%c0_9, %c0_10], %9 {strides = array<i32>} : memref<512x8xf32, #tpu.memory_space<vmem>>, vector<512x8xf32>,
    %c0_i32_11 = arith.constant 0 : i32
    %11 = arith.cmpi eq, %arg3, %c0_i32_11 : i32
    %12 = arith.extui %11 : i1 to i32
    %c0_i32_12 = arith.constant 0 : i32
    %13 = arith.cmpi ne, %12, %c0_i32_12 : i32
    scf.if %13 {
      %c0_13 = arith.constant 0 : index
      %c0_14 = arith.constant 0 : index
      %14 = vector.load %arg8[%c0_13, %c0_14] : memref<512x8xf32, #tpu.memory_space<vmem>>, vector<512x8xf32>
      %15 = tpu.transpose %14, [1, 0] : vector<512x8xf32> -> vector<8x512xf32>
      %c0_15 = arith.constant 0 : index
      %c0_16 = arith.constant 0 : index
      %c0_17 = arith.constant 0 : index
      %16 = vector.load %arg5[%c0_15, %c0_16, %c0_17] : memref<1x8x1xf32, #tpu.memory_space<vmem>>, vector<1x8x1xf32>
      %17 = vector.shape_cast %16 : vector<1x8x1xf32> to vector<8x1xf32>
      %18 = vector.broadcast %17 : vector<8x1xf32> to vector<8x512xf32>
      %19 = arith.addf %15, %18 : vector<8x512xf32>
      %c0_18 = arith.constant 0 : index
      %c0_19 = arith.constant 0 : index
      %c0_20 = arith.constant 0 : index
      %c0_21 = arith.constant 0 : index
      %20 = vector.load %arg7[%c0_18, %c0_19, %c0_20, %c0_21] : memref<1x1x8x512xf32, #tpu.memory_space<vmem>>, vector<1x1x8x512xf32>
      %21 = vector.shape_cast %20 : vector<1x1x8x512xf32> to vector<8x512xf32>
      %22 = vector.shape_cast %19 : vector<8x512xf32> to vector<1x1x8x512xf32>
      tpu.vector_store %arg7[%c0_18, %c0_19, %c0_20, %c0_21], %22 {strides = array<i32>} : memref<1x1x8x512xf32, #tpu.memory_space<vmem>>, vector<1x1x8x512xf32>,
    } else {
    }
    return
  }
  func.func @transform_0(%arg0: i32, %arg1: i32, %arg2: i32, %arg3: i32) -> (i32, i32, i32) {
    %c0_i32 = arith.constant 0 : i32
    %c0_i32_0 = arith.constant 0 : i32
    return %arg1, %arg3, %c0_i32 : i32, i32, i32
  }
  func.func @transform_1(%arg0: i32, %arg1: i32, %arg2: i32, %arg3: i32) -> (i32, i32, i32) {
    %c0_i32 = arith.constant 0 : i32
    %c0_i32_0 = arith.constant 0 : i32
    %c0_i32_1 = arith.constant 0 : i32
    return %arg1, %c0_i32, %c0_i32_0 : i32, i32, i32
  }
  func.func @transform_2(%arg0: i32, %arg1: i32, %arg2: i32, %arg3: i32) -> (i32, i32, i32, i32) {
    %c0_i32 = arith.constant 0 : i32
    return %arg0, %arg1, %arg2, %arg3 : i32, i32, i32, i32
  }
  func.func @transform_3(%arg0: i32, %arg1: i32, %arg2: i32, %arg3: i32) -> (i32, i32, i32, i32) {
    %c0_i32 = arith.constant 0 : i32
    %c0_i32_0 = arith.constant 0 : i32
    return %arg0, %arg1, %c0_i32, %arg2 : i32, i32, i32, i32
  }
}

</mosaic_0001>

<llo_original>
// kernel: deform_conv3d_forward.1
$region0: #{deform_conv3d_forward.1}
  #allocation0 [shape = 'u32[]', space=smem, size = 0x4, offset = 0x4, fixed_abs, tag = 'smem constant byte address 0x4 - core index']
  #allocation1 [shape = 'u32[144,128]{1,0:T(1,128)}', space=vmem, size = 0x12000, scoped, tag = 'internal scratch']
  #allocation2 [shape = 'f32[512,8]{1,0:T(8,128)}', space=vmem, size = 0x40000, scoped, tag = 'scratch operand']
  %s0 = inlined_call_operand.vmem [shape: bf16[1,108,8], index: 0, kind: input, shape index: {}]
  %s1 = inlined_call_operand.vmem [shape: f32[1,8,1], index: 1, kind: input, shape index: {}]
  %s2 = inlined_call_operand.vmem [shape: bf16[2,1,512,108], index: 2, kind: input, shape index: {}]
  %s3 = inlined_call_operand.vmem [shape: f32[2,1,8,512], index: 3, kind: output, shape index: {}]
  %s4 = sld [smem:[#allocation0]]
  $region53: #{deform_conv3d_forward.1} parent=0
    _
  %s6 = ssub.s32 1, %s4
  %s7 = scalar_select 0, %s6, %s4
  loop: start=0, step=1, limit=4
  $region2: #{deform_conv3d_forward.1} parent=0 // loop_pre_header
    _
  $region3: #{deform_conv3d_forward.1} parent=0 // loop_header
    %s9 = sphi 0, %s13
    %p10 = scmp.ge.s32.totalorder %s9, 4
    %s16 = sphi 0, %s42
    %s17 = sphi 0, %s38
    %s18 = sphi 0, %s34
    %s19 = sphi 0, %s30
    %s20 = sphi 0, %s16
    %s21 = sphi 0, %s17
    %s22 = sphi 0, %s18
    %s23 = sphi 0, %s19
    %s24 = sphi 0, %s20
    %s25 = sphi 0, %s21
    %s26 = sphi 0, %s22
    %s27 = sphi 0, %s23
    %s47 = sphi 0, %s49
    %s50 = sphi 0, %s47
    %s51 = sphi 0, %s50
    %s67 = sphi 0, %s51
    %s73 = sphi 0, %s75
    %s76 = sphi 0, %s73
    %s77 = sphi 0, %s76
    %s93 = sphi 0, %s77
    %s105 = sphi 0, %s107
    %s108 = sphi 0, %s105
    %s109 = sphi 0, %s108
    %s125 = sphi 0, %s109
    %s135 = sphi 0, %s137
    %s138 = sphi 0, %s135
    %s139 = sphi 0, %s138
    %s155 = sphi 0, %s139
  $region4: #{deform_conv3d_forward.1} parent=0 // loop_header_branch
    %12 = sbr.rel (%p10) target = $region8
  $region5: #{deform_conv3d_forward.1} parent=0 // loop_body
    %s14 = ssub.s32 %s9, 1
    %s15 = ssub.s32 %s9, 2
    %s28 = sadd.s32 1, %s19
    %p29 = scmp.ge.s32.totalorder %s28, 1
    %s30 = scalar_select %p29, 0, %s28
    %s31 = sadd.s32 1, %s18
    %s32 = scalar_select %p29, %s31, %s18
    %p33 = scmp.ge.s32.totalorder %s32, 1
    %s34 = scalar_select %p33, 0, %s32
    %s35 = sadd.s32 1, %s17
    %s36 = scalar_select %p33, %s35, %s17
    %p37 = scmp.ge.s32.totalorder %s36, 1
    %s38 = scalar_select %p37, 0, %s36
    %s39 = sadd.s32 1, %s16
    %s40 = scalar_select %p37, %s39, %s16
    %p41 = scmp.ge.s32.totalorder %s40, 2
    %s42 = scalar_select %p41, 0, %s40
    %s43 = ssub.s32 %s17, %s38
    %s44 = ssub.s32 %s19, %s30
    %s45 = sor.u32 %s43, %s44
    %p46 = scmp.eq.s32.totalorder %s45, 0
    %s48 = sadd.s32 %s47, 1
    %s49 = scalar_select %p46, %s47, %s48
    %p52 = pneg %p46
    %p53 = scmp.eq.s32.totalorder %s9, 1
    %p54 = por %p52, %p53
    %p55 = scmp.ne.s32.totalorder %s47, %s50
    %p56 = scmp.eq.s32.totalorder %s9, 0
    %p57 = por %p55, %p56
    %p58 = scmp.ne.s32.totalorder %s47, %s50
    %p59 = scmp.eq.s32.totalorder %s14, 1
    %p60 = por %p58, %p59
    %p61 = scmp.ne.s32.totalorder %s50, %s51
    %p62 = scmp.eq.s32.totalorder %s14, 0
    %p63 = por %p61, %p62
    %p64 = scmp.ne.s32.totalorder %s50, %s51
    %p65 = scmp.eq.s32.totalorder %s15, 1
    %p66 = por %p64, %p65
    %p68 = scmp.ne.s32.totalorder %s51, %s67
    %p69 = scmp.eq.s32.totalorder %s15, 0
    %p70 = por %p68, %p69
    %s71 = ssub.s32 %s17, %s38
    %p72 = scmp.eq.s32.totalorder %s71, 0
    %s74 = sadd.s32 %s73, 1
    %s75 = scalar_select %p72, %s73, %s74
    %p78 = pneg %p72
    %p79 = scmp.eq.s32.totalorder %s9, 1
    %p80 = por %p78, %p79
    %p81 = scmp.ne.s32.totalorder %s73, %s76
    %p82 = scmp.eq.s32.totalorder %s9, 0
    %p83 = por %p81, %p82
    %p84 = scmp.ne.s32.totalorder %s73, %s76
    %p85 = scmp.eq.s32.totalorder %s14, 1
    %p86 = por %p84, %p85
    %p87 = scmp.ne.s32.totalorder %s76, %s77
    %p88 = scmp.eq.s32.totalorder %s14, 0
    %p89 = por %p87, %p88
    %p90 = scmp.ne.s32.totalorder %s76, %s77
    %p91 = scmp.eq.s32.totalorder %s15, 1
    %p92 = por %p90, %p91
    %p94 = scmp.ne.s32.totalorder %s77, %s93
    %p95 = scmp.eq.s32.totalorder %s15, 0
    %p96 = por %p94, %p95
    %s97 = ssub.s32 %s16, %s42
    %s98 = ssub.s32 %s17, %s38
    %s99 = sor.u32 %s97, %s98
    %s100 = ssub.s32 %s18, %s34
    %s101 = sor.u32 %s99, %s100
    %s102 = ssub.s32 %s19, %s30
    %s103 = sor.u32 %s101, %s102
    %p104 = scmp.eq.s32.totalorder %s103, 0
    %s106 = sadd.s32 %s105, 1
    %s107 = scalar_select %p104, %s105, %s106
    %p110 = pneg %p104
    %p111 = scmp.eq.s32.totalorder %s9, 1
    %p112 = por %p110, %p111
    %p113 = scmp.ne.s32.totalorder %s105, %s108
    %p114 = scmp.eq.s32.totalorder %s9, 0
    %p115 = por %p113, %p114
    %p116 = scmp.ne.s32.totalorder %s105, %s108
    %p117 = scmp.eq.s32.totalorder %s14, 1
    %p118 = por %p116, %p117
    %p119 = scmp.ne.s32.totalorder %s108, %s109
    %p120 = scmp.eq.s32.totalorder %s14, 0
    %p121 = por %p119, %p120
    %p122 = scmp.ne.s32.totalorder %s108, %s109
    %p123 = scmp.eq.s32.totalorder %s15, 1
    %p124 = por %p122, %p123
    %p126 = scmp.ne.s32.totalorder %s109, %s125
    %p127 = scmp.eq.s32.totalorder %s15, 0
    %p128 = por %p126, %p127
    %s129 = ssub.s32 %s16, %s42
    %s130 = ssub.s32 %s17, %s38
    %s131 = sor.u32 %s129, %s130
    %s132 = ssub.s32 %s18, %s34
    %s133 = sor.u32 %s131, %s132
    %p134 = scmp.eq.s32.totalorder %s133, 0
    %s136 = sadd.s32 %s135, 1
    %s137 = scalar_select %p134, %s135, %s136
    %p140 = pneg %p134
    %p141 = scmp.eq.s32.totalorder %s9, 1
    %p142 = por %p140, %p141
    %p143 = scmp.ne.s32.totalorder %s135, %s138
    %p144 = scmp.eq.s32.totalorder %s9, 0
    %p145 = por %p143, %p144
    %p146 = scmp.ne.s32.totalorder %s135, %s138
    %p147 = scmp.eq.s32.totalorder %s14, 1
    %p148 = por %p146, %p147
    %p149 = scmp.ne.s32.totalorder %s138, %s139
    %p150 = scmp.eq.s32.totalorder %s14, 0
    %p151 = por %p149, %p150
    %p152 = scmp.ne.s32.totalorder %s138, %s139
    %p153 = scmp.eq.s32.totalorder %s15, 1
    %p154 = por %p152, %p153
    %p156 = scmp.ne.s32.totalorder %s139, %s155
    %p157 = scmp.eq.s32.totalorder %s15, 0
    %p158 = por %p156, %p157
    %p159 = scmp.le.s32.totalorder 1, %s9
    %p160 = scmp.lt.s32.totalorder %s9, 3
    %p161 = pnand %p159, %p160
    %p162 = pneg %p161
    // Predicated region
    $region9: #{deform_conv3d_forward.1} parent=5 // pred_check
      _
    $region10: #{deform_conv3d_forward.1} parent=5 // pred_check_branch
      %164 = sbr.rel (%p161) target = $region12
    $region11: #{deform_conv3d_forward.1} parent=5 // pred_region
      %s165 = ssub.s32 %s9, 1
      // Predicated region
      $region13: #{deform_conv3d_forward.1} parent=11 // pred_check
        %p166 = pneg %p63
      $region14: #{deform_conv3d_forward.1} parent=11 // pred_check_branch
        %168 = sbr.rel (%p166) target = $region16
      $region15: #{deform_conv3d_forward.1} parent=11 // pred_region
        %s169 = smul.u32 14, %s23
        %p170 = scmp.lt.s32.totalorder %s21, 0
        %s171 = scalar_select %p170, %s21, 0
        %p172 = scmp.lt.s32.totalorder %s169, 13
        %s173 = scalar_select %p172, %s169, 13
        %s174 = smul.addr %s171, 14
        %s175 = sadd.s32 %s173, %s174
        %s176 = smul.addr %s175, 4
        %s177 = scalar_lea.vmem %s0, %s176
        %s178 = smul.u32 14, %s23
      $region16: #{deform_conv3d_forward.1} parent=11 // pred_fallthru
        _
      // Predicated region
      $region17: #{deform_conv3d_forward.1} parent=11 // pred_check
        %p179 = pneg %p89
      $region18: #{deform_conv3d_forward.1} parent=11 // pred_check_branch
        %181 = sbr.rel (%p179) target = $region20
      $region19: #{deform_conv3d_forward.1} parent=11 // pred_region
        %p182 = scmp.lt.s32.totalorder %s21, 0
        %s183 = scalar_select %p182, %s21, 0
        %s184 = smul.addr %s183, 8
        %s185 = scalar_lea.vmem %s1, %s184
      $region20: #{deform_conv3d_forward.1} parent=11 // pred_fallthru
        _
    $region12: #{deform_conv3d_forward.1} parent=5 // pred_fallthru
      _
    %p186 = scmp.lt.s32.totalorder %s9, 2
    // Predicated region
    $region21: #{deform_conv3d_forward.1} parent=5 // pred_check
      %p187 = pneg %p186
    $region22: #{deform_conv3d_forward.1} parent=5 // pred_check_branch
      %189 = sbr.rel (%p187) target = $region24
    $region23: #{deform_conv3d_forward.1} parent=5 // pred_region
      // Predicated region
      $region25: #{deform_conv3d_forward.1} parent=23 // pred_check
        %p190 = pneg %p115
      $region26: #{deform_conv3d_forward.1} parent=23 // pred_check_branch
        %192 = sbr.rel (%p190) target = $region28
      $region27: #{deform_conv3d_forward.1} parent=23 // pred_region
        %s193 = smul.u32 64, %s18
        %p194 = scmp.lt.s32.totalorder %s16, 1
        %s195 = scalar_select %p194, %s16, 1
        %p196 = scmp.lt.s32.totalorder %s17, 0
        %s197 = scalar_select %p196, %s17, 0
        %p198 = scmp.lt.s32.totalorder %s193, 63
        %s199 = scalar_select %p198, %s193, 63
        %p200 = scmp.lt.s32.totalorder %s19, 0
        %s201 = scalar_select %p200, %s19, 0
        %s202 = sadd.s32 %s201, %s199
        %s203 = smul.addr %s197, 64
        %s204 = sadd.s32 %s202, %s203
        %s205 = smul.addr %s195, 64
        %s206 = sadd.s32 %s204, %s205
        %s207 = smul.addr %s206, 4
        %s208 = scalar_lea.vmem %s2, %s207
        %s209 = smul.u32 64, %s18
      $region28: #{deform_conv3d_forward.1} parent=23 // pred_fallthru
        _
    $region24: #{deform_conv3d_forward.1} parent=5 // pred_fallthru
      _
    %p210 = scmp.le.s32.totalorder 1, %s9
    %p211 = scmp.lt.s32.totalorder %s9, 3
    %p212 = pnand %p210, %p211
    %p213 = pneg %p212
    // Predicated region
    $region29: #{deform_conv3d_forward.1} parent=5 // pred_check
      _
    $region30: #{deform_conv3d_forward.1} parent=5 // pred_check_branch
      %215 = sbr.rel (%p212) target = $region32
    $region31: #{deform_conv3d_forward.1} parent=5 // pred_region
      %s216 = ssub.s32 %s9, 1
      %s217 = smul.u32 14, %s23
      %p218 = scmp.lt.s32.totalorder %s21, 0
      %s219 = scalar_select %p218, %s21, 0
      %p220 = scmp.lt.s32.totalorder %s217, 13
      %s221 = scalar_select %p220, %s217, 13
      %s222 = smul.addr %s219, 14
      %s223 = sadd.s32 %s221, %s222
      %s224 = smul.addr %s223, 4
      %s225 = scalar_lea.vmem %s0, %s224
      %p226 = pneg %p63
      %p227 = pneg %p60
      %p228 = scmp.lt.s32.totalorder %s21, 0
      %s229 = scalar_select %p228, %s21, 0
      %s230 = smul.addr %s229, 8
      %s231 = scalar_lea.vmem %s1, %s230
      %p232 = pneg %p89
      %p233 = pneg %p86
      %s234 = smul.u32 64, %s22
      %p235 = scmp.lt.s32.totalorder %s20, 1
      %s236 = scalar_select %p235, %s20, 1
      %p237 = scmp.lt.s32.totalorder %s21, 0
      %s238 = scalar_select %p237, %s21, 0
      %p239 = scmp.lt.s32.totalorder %s234, 63
      %s240 = scalar_select %p239, %s234, 63
      %p241 = scmp.lt.s32.totalorder %s23, 0
      %s242 = scalar_select %p241, %s23, 0
      %s243 = sadd.s32 %s242, %s240
      %s244 = smul.addr %s238, 64
      %s245 = sadd.s32 %s243, %s244
      %s246 = smul.addr %s236, 64
      %s247 = sadd.s32 %s245, %s246
      %s248 = smul.addr %s247, 4
      %s249 = scalar_lea.vmem %s2, %s248
      %p250 = pneg %p121
      %p251 = pneg %p118
      %p252 = pneg %p151
      %p253 = pneg %p148
      %s254 = smul.u32 4, %s22
      %p255 = scmp.lt.s32.totalorder %s20, 1
      %s256 = scalar_select %p255, %s20, 1
      %p257 = scmp.lt.s32.totalorder %s21, 0
      %s258 = scalar_select %p257, %s21, 0
      %p259 = scmp.lt.s32.totalorder %s254, 3
      %s260 = scalar_select %p259, %s254, 3
      %s261 = smul.addr %s258, 4
      %s262 = sadd.s32 %s260, %s261
      %s263 = smul.addr %s256, 4
      %s264 = sadd.s32 %s262, %s263
      %s265 = smul.addr %s264, 8
      %s266 = scalar_lea.vmem %s3, %s265
      %s267 = smul.u32 14, %s23
      %p268 = scmp.lt.s32.totalorder %s21, 0
      %s269 = scalar_select %p268, %s21, 0
      %p270 = scmp.lt.s32.totalorder %s267, 13
      %s271 = scalar_select %p270, %s267, 13
      %s272 = smul.addr %s269, 14
      %s273 = sadd.s32 %s271, %s272
      %s274 = smul.addr %s273, 4
      %s275 = scalar_lea.vmem %s0, %s274
      %s276 = smul.u32 14, %s23
      %p277 = scmp.lt.s32.totalorder %s21, 0
      %s278 = scalar_select %p277, %s21, 0
      %s279 = smul.addr %s278, 8
      %s280 = scalar_lea.vmem %s1, %s279
      %s281 = smul.u32 64, %s22
      %p282 = scmp.lt.s32.totalorder %s20, 1
      %s283 = scalar_select %p282, %s20, 1
      %p284 = scmp.lt.s32.totalorder %s21, 0
      %s285 = scalar_select %p284, %s21, 0
      %p286 = scmp.lt.s32.totalorder %s281, 63
      %s287 = scalar_select %p286, %s281, 63
      %p288 = scmp.lt.s32.totalorder %s23, 0
      %s289 = scalar_select %p288, %s23, 0
      %s290 = sadd.s32 %s289, %s287
      %s291 = smul.addr %s285, 64
      %s292 = sadd.s32 %s290, %s291
      %s293 = smul.addr %s283, 64
      %s294 = sadd.s32 %s292, %s293
      %s295 = smul.addr %s294, 4
      %s296 = scalar_lea.vmem %s2, %s295
      %s297 = smul.u32 64, %s22
      %s298 = smul.u32 4, %s22
      %p299 = scmp.lt.s32.totalorder %s20, 1
      %s300 = scalar_select %p299, %s20, 1
      %p301 = scmp.lt.s32.totalorder %s21, 0
      %s302 = scalar_select %p301, %s21, 0
      %p303 = scmp.lt.s32.totalorder %s298, 3
      %s304 = scalar_select %p303, %s298, 3
      %s305 = smul.addr %s302, 4
      %s306 = sadd.s32 %s304, %s305
      %s307 = smul.addr %s300, 4
      %s308 = sadd.s32 %s306, %s307
      %s309 = smul.addr %s308, 8
      %s310 = scalar_lea.vmem %s3, %s309
      %s311 = smul.u32 4, %s22
      %p313 = scmp.eq.s32.totalorder %s23, 0
      // Predicated region
      $region33: #{deform_conv3d_forward.1} parent=31 // pred_check
        %p314 = pneg %p313
      $region34: #{deform_conv3d_forward.1} parent=31 // pred_check_branch
        %316 = sbr.rel (%p314) target = $region36
      $region35: #{deform_conv3d_forward.1} parent=31 // pred_region
        %vm317 = vcmask 64512
        %318 = vst.msk [vmem:[#allocation2] sm:$0xff] %vm317, 0.0
        %319 = vst.msk [vmem:[#allocation2 + $0x8] sm:$0xff] %vm317, 0.0
        %320 = vst.msk [vmem:[#allocation2 + $0x10] sm:$0xff] %vm317, 0.0
        %321 = vst.msk [vmem:[#allocation2 + $0x18] sm:$0xff] %vm317, 0.0
        %322 = vst.msk [vmem:[#allocation2 + $0x20] sm:$0xff] %vm317, 0.0
        %323 = vst.msk [vmem:[#allocation2 + $0x28] sm:$0xff] %vm317, 0.0
        %324 = vst.msk [vmem:[#allocation2 + $0x30] sm:$0xff] %vm317, 0.0
        %325 = vst.msk [vmem:[#allocation2 + $0x38] sm:$0xff] %vm317, 0.0
        %326 = vst.msk [vmem:[#allocation2 + $0x40] sm:$0xff] %vm317, 0.0
        %327 = vst.msk [vmem:[#allocation2 + $0x48] sm:$0xff] %vm317, 0.0
        %328 = vst.msk [vmem:[#allocation2 + $0x50] sm:$0xff] %vm317, 0.0
        %329 = vst.msk [vmem:[#allocation2 + $0x58] sm:$0xff] %vm317, 0.0
        %330 = vst.msk [vmem:[#allocation2 + $0x60] sm:$0xff] %vm317, 0.0
        %331 = vst.msk [vmem:[#allocation2 + $0x68] sm:$0xff] %vm317, 0.0
        %332 = vst.msk [vmem:[#allocation2 + $0x70] sm:$0xff] %vm317, 0.0
        %333 = vst.msk [vmem:[#allocation2 + $0x78] sm:$0xff] %vm317, 0.0
        %334 = vst.msk [vmem:[#allocation2 + $0x80] sm:$0xff] %vm317, 0.0
        %335 = vst.msk [vmem:[#allocation2 + $0x88] sm:$0xff] %vm317, 0.0
        %336 = vst.msk [vmem:[#allocation2 + $0x90] sm:$0xff] %vm317, 0.0
        %337 = vst.msk [vmem:[#allocation2 + $0x98] sm:$0xff] %vm317, 0.0
        %338 = vst.msk [vmem:[#allocation2 + $0xa0] sm:$0xff] %vm317, 0.0
        %339 = vst.msk [vmem:[#allocation2 + $0xa8] sm:$0xff] %vm317, 0.0
        %340 = vst.msk [vmem:[#allocation2 + $0xb0] sm:$0xff] %vm317, 0.0
        %341 = vst.msk [vmem:[#allocation2 + $0xb8] sm:$0xff] %vm317, 0.0
        %342 = vst.msk [vmem:[#allocation2 + $0xc0] sm:$0xff] %vm317, 0.0
        %343 = vst.msk [vmem:[#allocation2 + $0xc8] sm:$0xff] %vm317, 0.0
        %344 = vst.msk [vmem:[#allocation2 + $0xd0] sm:$0xff] %vm317, 0.0
        %345 = vst.msk [vmem:[#allocation2 + $0xd8] sm:$0xff] %vm317, 0.0
        %346 = vst.msk [vmem:[#allocation2 + $0xe0] sm:$0xff] %vm317, 0.0
        %347 = vst.msk [vmem:[#allocation2 + $0xe8] sm:$0xff] %vm317, 0.0
        %348 = vst.msk [vmem:[#allocation2 + $0xf0] sm:$0xff] %vm317, 0.0
        %349 = vst.msk [vmem:[#allocation2 + $0xf8] sm:$0xff] %vm317, 0.0
        %350 = vst.msk [vmem:[#allocation2 + $0x100] sm:$0xff] %vm317, 0.0
        %351 = vst.msk [vmem:[#allocation2 + $0x108] sm:$0xff] %vm317, 0.0
        %352 = vst.msk [vmem:[#allocation2 + $0x110] sm:$0xff] %vm317, 0.0
        %353 = vst.msk [vmem:[#allocation2 + $0x118] sm:$0xff] %vm317, 0.0
        %354 = vst.msk [vmem:[#allocation2 + $0x120] sm:$0xff] %vm317, 0.0
        %355 = vst.msk [vmem:[#allocation2 + $0x128] sm:$0xff] %vm317, 0.0
        %356 = vst.msk [vmem:[#allocation2 + $0x130] sm:$0xff] %vm317, 0.0
        %357 = vst.msk [vmem:[#allocation2 + $0x138] sm:$0xff] %vm317, 0.0
        %358 = vst.msk [vmem:[#allocation2 + $0x140] sm:$0xff] %vm317, 0.0
        %359 = vst.msk [vmem:[#allocation2 + $0x148] sm:$0xff] %vm317, 0.0
        %360 = vst.msk [vmem:[#allocation2 + $0x150] sm:$0xff] %vm317, 0.0
        %361 = vst.msk [vmem:[#allocation2 + $0x158] sm:$0xff] %vm317, 0.0
        %362 = vst.msk [vmem:[#allocation2 + $0x160] sm:$0xff] %vm317, 0.0
        %363 = vst.msk [vmem:[#allocation2 + $0x168] sm:$0xff] %vm317, 0.0
        %364 = vst.msk [vmem:[#allocation2 + $0x170] sm:$0xff] %vm317, 0.0
        %365 = vst.msk [vmem:[#allocation2 + $0x178] sm:$0xff] %vm317, 0.0
        %366 = vst.msk [vmem:[#allocation2 + $0x180] sm:$0xff] %vm317, 0.0
        %367 = vst.msk [vmem:[#allocation2 + $0x188] sm:$0xff] %vm317, 0.0
        %368 = vst.msk [vmem:[#allocation2 + $0x190] sm:$0xff] %vm317, 0.0
        %369 = vst.msk [vmem:[#allocation2 + $0x198] sm:$0xff] %vm317, 0.0
        %370 = vst.msk [vmem:[#allocation2 + $0x1a0] sm:$0xff] %vm317, 0.0
        %371 = vst.msk [vmem:[#allocation2 + $0x1a8] sm:$0xff] %vm317, 0.0
        %372 = vst.msk [vmem:[#allocation2 + $0x1b0] sm:$0xff] %vm317, 0.0
        %373 = vst.msk [vmem:[#allocation2 + $0x1b8] sm:$0xff] %vm317, 0.0
        %374 = vst.msk [vmem:[#allocation2 + $0x1c0] sm:$0xff] %vm317, 0.0
        %375 = vst.msk [vmem:[#allocation2 + $0x1c8] sm:$0xff] %vm317, 0.0
        %376 = vst.msk [vmem:[#allocation2 + $0x1d0] sm:$0xff] %vm317, 0.0
        %377 = vst.msk [vmem:[#allocation2 + $0x1d8] sm:$0xff] %vm317, 0.0
        %378 = vst.msk [vmem:[#allocation2 + $0x1e0] sm:$0xff] %vm317, 0.0
        %379 = vst.msk [vmem:[#allocation2 + $0x1e8] sm:$0xff] %vm317, 0.0
        %380 = vst.msk [vmem:[#allocation2 + $0x1f0] sm:$0xff] %vm317, 0.0
        %381 = vst.msk [vmem:[#allocation2 + $0x1f8] sm:$0xff] %vm317, 0.0
      $region36: #{deform_conv3d_forward.1} parent=31 // pred_fallthru
        _
      %v382 = vld [vmem:[#allocation2] sm:$0xff]
      %v383 = vld [vmem:[#allocation2 + $0x8] sm:$0xff]
      %v384 = vld [vmem:[#allocation2 + $0x10] sm:$0xff]
      %v385 = vld [vmem:[#allocation2 + $0x18] sm:$0xff]
      %v386 = vld [vmem:[#allocation2 + $0x20] sm:$0xff]
      %v387 = vld [vmem:[#allocation2 + $0x28] sm:$0xff]
      %v388 = vld [vmem:[#allocation2 + $0x30] sm:$0xff]
      %v389 = vld [vmem:[#allocation2 + $0x38] sm:$0xff]
      %v390 = vld [vmem:[#allocation2 + $0x40] sm:$0xff]
      %v391 = vld [vmem:[#allocation2 + $0x48] sm:$0xff]
      %v392 = vld [vmem:[#allocation2 + $0x50] sm:$0xff]
      %v393 = vld [vmem:[#allocation2 + $0x58] sm:$0xff]
      %v394 = vld [vmem:[#allocation2 + $0x60] sm:$0xff]
      %v395 = vld [vmem:[#allocation2 + $0x68] sm:$0xff]
      %v396 = vld [vmem:[#allocation2 + $0x70] sm:$0xff]
      %v397 = vld [vmem:[#allocation2 + $0x78] sm:$0xff]
      %v398 = vld [vmem:[#allocation2 + $0x80] sm:$0xff]
      %v399 = vld [vmem:[#allocation2 + $0x88] sm:$0xff]
      %v400 = vld [vmem:[#allocation2 + $0x90] sm:$0xff]
      %v401 = vld [vmem:[#allocation2 + $0x98] sm:$0xff]
      %v402 = vld [vmem:[#allocation2 + $0xa0] sm:$0xff]
      %v403 = vld [vmem:[#allocation2 + $0xa8] sm:$0xff]
      %v404 = vld [vmem:[#allocation2 + $0xb0] sm:$0xff]
      %v405 = vld [vmem:[#allocation2 + $0xb8] sm:$0xff]
      %v406 = vld [vmem:[#allocation2 + $0xc0] sm:$0xff]
      %v407 = vld [vmem:[#allocation2 + $0xc8] sm:$0xff]
      %v408 = vld [vmem:[#allocation2 + $0xd0] sm:$0xff]
      %v409 = vld [vmem:[#allocation2 + $0xd8] sm:$0xff]
      %v410 = vld [vmem:[#allocation2 + $0xe0] sm:$0xff]
      %v411 = vld [vmem:[#allocation2 + $0xe8] sm:$0xff]
      %v412 = vld [vmem:[#allocation2 + $0xf0] sm:$0xff]
      %v413 = vld [vmem:[#allocation2 + $0xf8] sm:$0xff]
      %v414 = vld [vmem:[#allocation2 + $0x100] sm:$0xff]
      %v415 = vld [vmem:[#allocation2 + $0x108] sm:$0xff]
      %v416 = vld [vmem:[#allocation2 + $0x110] sm:$0xff]
      %v417 = vld [vmem:[#allocation2 + $0x118] sm:$0xff]
      %v418 = vld [vmem:[#allocation2 + $0x120] sm:$0xff]
      %v419 = vld [vmem:[#allocation2 + $0x128] sm:$0xff]
      %v420 = vld [vmem:[#allocation2 + $0x130] sm:$0xff]
      %v421 = vld [vmem:[#allocation2 + $0x138] sm:$0xff]
      %v422 = vld [vmem:[#allocation2 + $0x140] sm:$0xff]
      %v423 = vld [vmem:[#allocation2 + $0x148] sm:$0xff]
      %v424 = vld [vmem:[#allocation2 + $0x150] sm:$0xff]
      %v425 = vld [vmem:[#allocation2 + $0x158] sm:$0xff]
      %v426 = vld [vmem:[#allocation2 + $0x160] sm:$0xff]
      %v427 = vld [vmem:[#allocation2 + $0x168] sm:$0xff]
      %v428 = vld [vmem:[#allocation2 + $0x170] sm:$0xff]
      %v429 = vld [vmem:[#allocation2 + $0x178] sm:$0xff]
      %v430 = vld [vmem:[#allocation2 + $0x180] sm:$0xff]
      %v431 = vld [vmem:[#allocation2 + $0x188] sm:$0xff]
      %v432 = vld [vmem:[#allocation2 + $0x190] sm:$0xff]
      %v433 = vld [vmem:[#allocation2 + $0x198] sm:$0xff]
      %v434 = vld [vmem:[#allocation2 + $0x1a0] sm:$0xff]
      %v435 = vld [vmem:[#allocation2 + $0x1a8] sm:$0xff]
      %v436 = vld [vmem:[#allocation2 + $0x1b0] sm:$0xff]
      %v437 = vld [vmem:[#allocation2 + $0x1b8] sm:$0xff]
      %v438 = vld [vmem:[#allocation2 + $0x1c0] sm:$0xff]
      %v439 = vld [vmem:[#allocation2 + $0x1c8] sm:$0xff]
      %v440 = vld [vmem:[#allocation2 + $0x1d0] sm:$0xff]
      %v441 = vld [vmem:[#allocation2 + $0x1d8] sm:$0xff]
      %v442 = vld [vmem:[#allocation2 + $0x1e0] sm:$0xff]
      %v443 = vld [vmem:[#allocation2 + $0x1e8] sm:$0xff]
      %v444 = vld [vmem:[#allocation2 + $0x1f0] sm:$0xff]
      %v445 = vld [vmem:[#allocation2 + $0x1f8] sm:$0xff]
      %v446 = vld [vmem:[%s296] sm:$0xf]
      %v447 = vld [vmem:[%s296 + $0x4] sm:$0xf]
      %v448 = vld [vmem:[%s296 + $0x8] sm:$0xf]
      %v449 = vld [vmem:[%s296 + $0xc] sm:$0xf]
      %v450 = vld [vmem:[%s296 + $0x10] sm:$0xf]
      %v451 = vld [vmem:[%s296 + $0x14] sm:$0xf]
      %v452 = vld [vmem:[%s296 + $0x18] sm:$0xf]
      %v453 = vld [vmem:[%s296 + $0x1c] sm:$0xf]
      %v454 = vld [vmem:[%s296 + $0x20] sm:$0xf]
      %v455 = vld [vmem:[%s296 + $0x24] sm:$0xf]
      %v456 = vld [vmem:[%s296 + $0x28] sm:$0xf]
      %v457 = vld [vmem:[%s296 + $0x2c] sm:$0xf]
      %v458 = vld [vmem:[%s296 + $0x30] sm:$0xf]
      %v459 = vld [vmem:[%s296 + $0x34] sm:$0xf]
      %v460 = vld [vmem:[%s296 + $0x38] sm:$0xf]
      %v461 = vld [vmem:[%s296 + $0x3c] sm:$0xf]
      %v462 = vld [vmem:[%s296 + $0x40] sm:$0xf]
      %v463 = vld [vmem:[%s296 + $0x44] sm:$0xf]
      %v464 = vld [vmem:[%s296 + $0x48] sm:$0xf]
      %v465 = vld [vmem:[%s296 + $0x4c] sm:$0xf]
      %v466 = vld [vmem:[%s296 + $0x50] sm:$0xf]
      %v467 = vld [vmem:[%s296 + $0x54] sm:$0xf]
      %v468 = vld [vmem:[%s296 + $0x58] sm:$0xf]
      %v469 = vld [vmem:[%s296 + $0x5c] sm:$0xf]
      %v470 = vld [vmem:[%s296 + $0x60] sm:$0xf]
      %v471 = vld [vmem:[%s296 + $0x64] sm:$0xf]
      %v472 = vld [vmem:[%s296 + $0x68] sm:$0xf]
      %v473 = vld [vmem:[%s296 + $0x6c] sm:$0xf]
      %v474 = vld [vmem:[%s296 + $0x70] sm:$0xf]
      %v475 = vld [vmem:[%s296 + $0x74] sm:$0xf]
      %v476 = vld [vmem:[%s296 + $0x78] sm:$0xf]
      %v477 = vld [vmem:[%s296 + $0x7c] sm:$0xf]
      %v478 = vld [vmem:[%s296 + $0x80] sm:$0xf]
      %v479 = vld [vmem:[%s296 + $0x84] sm:$0xf]
      %v480 = vld [vmem:[%s296 + $0x88] sm:$0xf]
      %v481 = vld [vmem:[%s296 + $0x8c] sm:$0xf]
      %v482 = vld [vmem:[%s296 + $0x90] sm:$0xf]
      %v483 = vld [vmem:[%s296 + $0x94] sm:$0xf]
      %v484 = vld [vmem:[%s296 + $0x98] sm:$0xf]
      %v485 = vld [vmem:[%s296 + $0x9c] sm:$0xf]
      %v486 = vld [vmem:[%s296 + $0xa0] sm:$0xf]
      %v487 = vld [vmem:[%s296 + $0xa4] sm:$0xf]
      %v488 = vld [vmem:[%s296 + $0xa8] sm:$0xf]
      %v489 = vld [vmem:[%s296 + $0xac] sm:$0xf]
      %v490 = vld [vmem:[%s296 + $0xb0] sm:$0xf]
      %v491 = vld [vmem:[%s296 + $0xb4] sm:$0xf]
      %v492 = vld [vmem:[%s296 + $0xb8] sm:$0xf]
      %v493 = vld [vmem:[%s296 + $0xbc] sm:$0xf]
      %v494 = vld [vmem:[%s296 + $0xc0] sm:$0xf]
      %v495 = vld [vmem:[%s296 + $0xc4] sm:$0xf]
      %v496 = vld [vmem:[%s296 + $0xc8] sm:$0xf]
      %v497 = vld [vmem:[%s296 + $0xcc] sm:$0xf]
      %v498 = vld [vmem:[%s296 + $0xd0] sm:$0xf]
      %v499 = vld [vmem:[%s296 + $0xd4] sm:$0xf]
      %v500 = vld [vmem:[%s296 + $0xd8] sm:$0xf]
      %v501 = vld [vmem:[%s296 + $0xdc] sm:$0xf]
      %v502 = vld [vmem:[%s296 + $0xe0] sm:$0xf]
      %v503 = vld [vmem:[%s296 + $0xe4] sm:$0xf]
      %v504 = vld [vmem:[%s296 + $0xe8] sm:$0xf]
      %v505 = vld [vmem:[%s296 + $0xec] sm:$0xf]
      %v506 = vld [vmem:[%s296 + $0xf0] sm:$0xf]
      %v507 = vld [vmem:[%s296 + $0xf4] sm:$0xf]
      %v508 = vld [vmem:[%s296 + $0xf8] sm:$0xf]
      %v509 = vld [vmem:[%s296 + $0xfc] sm:$0xf]
      %v510 = vld [vmem:[%s275] sm:$0xf]
      %v511 = vld [vmem:[%s275 + $0x4] sm:$0xf]
      %v512 = vld [vmem:[%s275 + $0x8] sm:$0xf]
      %v513 = vld [vmem:[%s275 + $0xc] sm:$0xf]
      %v514 = vld [vmem:[%s275 + $0x10] sm:$0xf]
      %v515 = vld [vmem:[%s275 + $0x14] sm:$0xf]
      %v516 = vld [vmem:[%s275 + $0x18] sm:$0xf]
      %v517 = vld [vmem:[%s275 + $0x1c] sm:$0xf]
      %v518 = vld [vmem:[%s275 + $0x20] sm:$0xf]
      %v519 = vld [vmem:[%s275 + $0x24] sm:$0xf]
      %v520 = vld [vmem:[%s275 + $0x28] sm:$0xf]
      %v521 = vld [vmem:[%s275 + $0x2c] sm:$0xf]
      %v522 = vld [vmem:[%s275 + $0x30] sm:$0xf]
      %v523 = vld [vmem:[%s275 + $0x34] sm:$0x3]
      %v588 = vunpack.c.l.b16 %v446
      %v589 = vunpack.c.l.b16 %v447
      %v590 = vunpack.c.l.b16 %v448
      %v591 = vunpack.c.l.b16 %v449
      %v592 = vunpack.c.l.b16 %v450
      %v593 = vunpack.c.l.b16 %v451
      %v594 = vunpack.c.l.b16 %v452
      %v595 = vunpack.c.l.b16 %v453
      %v596 = vunpack.c.l.b16 %v454
      %v597 = vunpack.c.l.b16 %v455
      %v598 = vunpack.c.l.b16 %v456
      %v599 = vunpack.c.l.b16 %v457
      %v600 = vunpack.c.l.b16 %v458
      %v601 = vunpack.c.l.b16 %v459
      %v602 = vunpack.c.l.b16 %v460
      %v603 = vunpack.c.l.b16 %v461
      %v604 = vunpack.c.l.b16 %v462
      %v605 = vunpack.c.l.b16 %v463
      %v606 = vunpack.c.l.b16 %v464
      %v607 = vunpack.c.l.b16 %v465
      %v608 = vunpack.c.l.b16 %v466
      %v609 = vunpack.c.l.b16 %v467
      %v610 = vunpack.c.l.b16 %v468
      %v611 = vunpack.c.l.b16 %v469
      %v612 = vunpack.c.l.b16 %v470
      %v613 = vunpack.c.l.b16 %v471
      %v614 = vunpack.c.l.b16 %v472
      %v615 = vunpack.c.l.b16 %v473
      %v616 = vunpack.c.l.b16 %v474
      %v617 = vunpack.c.l.b16 %v475
      %v618 = vunpack.c.l.b16 %v476
      %v619 = vunpack.c.l.b16 %v477
      %v620 = vunpack.c.l.b16 %v478
      %v621 = vunpack.c.l.b16 %v479
      %v622 = vunpack.c.l.b16 %v480
      %v623 = vunpack.c.l.b16 %v481
      %v624 = vunpack.c.l.b16 %v482
      %v625 = vunpack.c.l.b16 %v483
      %v626 = vunpack.c.l.b16 %v484
      %v627 = vunpack.c.l.b16 %v485
      %v628 = vunpack.c.l.b16 %v486
      %v629 = vunpack.c.l.b16 %v487
      %v630 = vunpack.c.l.b16 %v488
      %v631 = vunpack.c.l.b16 %v489
      %v632 = vunpack.c.l.b16 %v490
      %v633 = vunpack.c.l.b16 %v491
      %v634 = vunpack.c.l.b16 %v492
      %v635 = vunpack.c.l.b16 %v493
      %v636 = vunpack.c.l.b16 %v494
      %v637 = vunpack.c.l.b16 %v495
      %v638 = vunpack.c.l.b16 %v496
      %v639 = vunpack.c.l.b16 %v497
      %v640 = vunpack.c.l.b16 %v498
      %v641 = vunpack.c.l.b16 %v499
      %v642 = vunpack.c.l.b16 %v500
      %v643 = vunpack.c.l.b16 %v501
      %v644 = vunpack.c.l.b16 %v502
      %v645 = vunpack.c.l.b16 %v503
      %v646 = vunpack.c.l.b16 %v504
      %v647 = vunpack.c.l.b16 %v505
      %v648 = vunpack.c.l.b16 %v506
      %v649 = vunpack.c.l.b16 %v507
      %v650 = vunpack.c.l.b16 %v508
      %v651 = vunpack.c.l.b16 %v509
      %v652 = vpack.c.b16 %v589, %v588
      %v653 = vpack.c.b16 %v591, %v590
      %v654 = vpack.c.b16 %v593, %v592
      %v655 = vpack.c.b16 %v595, %v594
      %v656 = vpack.c.b16 %v597, %v596
      %v657 = vpack.c.b16 %v599, %v598
      %v658 = vpack.c.b16 %v601, %v600
      %v659 = vpack.c.b16 %v603, %v602
      %v660 = vpack.c.b16 %v605, %v604
      %v661 = vpack.c.b16 %v607, %v606
      %v662 = vpack.c.b16 %v609, %v608
      %v663 = vpack.c.b16 %v611, %v610
      %v664 = vpack.c.b16 %v613, %v612
      %v665 = vpack.c.b16 %v615, %v614
      %v666 = vpack.c.b16 %v617, %v616
      %v667 = vpack.c.b16 %v619, %v618
      %v668 = vpack.c.b16 %v621, %v620
      %v669 = vpack.c.b16 %v623, %v622
      %v670 = vpack.c.b16 %v625, %v624
      %v671 = vpack.c.b16 %v627, %v626
      %v672 = vpack.c.b16 %v629, %v628
      %v673 = vpack.c.b16 %v631, %v630
      %v674 = vpack.c.b16 %v633, %v632
      %v675 = vpack.c.b16 %v635, %v634
      %v676 = vpack.c.b16 %v637, %v636
      %v677 = vpack.c.b16 %v639, %v638
      %v678 = vpack.c.b16 %v641, %v640
      %v679 = vpack.c.b16 %v643, %v642
      %v680 = vpack.c.b16 %v645, %v644
      %v681 = vpack.c.b16 %v647, %v646
      %v682 = vpack.c.b16 %v649, %v648
      %v683 = vpack.c.b16 %v651, %v650
      %v698 = vunpack.c.l.b16 %v510
      %v699 = vunpack.c.l.b16 %v511
      %v700 = vunpack.c.l.b16 %v512
      %v701 = vunpack.c.l.b16 %v513
      %v702 = vunpack.c.l.b16 %v514
      %v703 = vunpack.c.l.b16 %v515
      %v704 = vunpack.c.l.b16 %v516
      %v705 = vunpack.c.l.b16 %v517
      %v706 = vunpack.c.l.b16 %v518
      %v707 = vunpack.c.l.b16 %v519
      %v708 = vunpack.c.l.b16 %v520
      %v709 = vunpack.c.l.b16 %v521
      %v710 = vunpack.c.l.b16 %v522
      %v711 = vunpack.c.l.b16 %v523
      %v712 = vpack.c.b16 %v699, %v698
      %v713 = vpack.c.b16 %v701, %v700
      %v714 = vpack.c.b16 %v703, %v702
      %v715 = vpack.c.b16 %v705, %v704
      %v716 = vpack.c.b16 %v707, %v706
      %v717 = vpack.c.b16 %v709, %v708
      %v718 = vpack.c.b16 %v711, %v710
      %vm725 = vcmask 883712
      %v727 = vsel %vm725, %v652, 0
      %v730 = vsel %vm725, %v653, 0
      %v733 = vsel %vm725, %v654, 0
      %v736 = vsel %vm725, %v655, 0
      %v739 = vsel %vm725, %v656, 0
      %v742 = vsel %vm725, %v657, 0
      %v745 = vsel %vm725, %v658, 0
      %v748 = vsel %vm725, %v659, 0
      %v751 = vsel %vm725, %v660, 0
      %v754 = vsel %vm725, %v661, 0
      %v757 = vsel %vm725, %v662, 0
      %v760 = vsel %vm725, %v663, 0
      %v763 = vsel %vm725, %v664, 0
      %v766 = vsel %vm725, %v665, 0
      %v769 = vsel %vm725, %v666, 0
      %v772 = vsel %vm725, %v667, 0
      %v775 = vsel %vm725, %v668, 0
      %v778 = vsel %vm725, %v669, 0
      %v781 = vsel %vm725, %v670, 0
      %v784 = vsel %vm725, %v671, 0
      %v787 = vsel %vm725, %v672, 0
      %v790 = vsel %vm725, %v673, 0
      %v793 = vsel %vm725, %v674, 0
      %v796 = vsel %vm725, %v675, 0
      %v799 = vsel %vm725, %v676, 0
      %v802 = vsel %vm725, %v677, 0
      %v805 = vsel %vm725, %v678, 0
      %v808 = vsel %vm725, %v679, 0
      %v811 = vsel %vm725, %v680, 0
      %v814 = vsel %vm725, %v681, 0
      %v817 = vsel %vm725, %v682, 0
      %v820 = vsel %vm725, %v683, 0
      %vm822 = vcmask 1045504
      %v824 = vsel %vm822, %v718, 0
      %826 = vmatprep.subr.bf16.mxu0 0
      %827 = vmatpush1.bf16.msra.mxu0 %v712
      %828 = vmatprep.subr.bf16.mxu0 0
      %829 = vmatpush1.bf16.msra.mxu0 %v713
      %830 = vmatprep.subr.bf16.mxu0 0
      %831 = vmatpush1.bf16.msra.mxu0 %v714
      %832 = vmatprep.subr.bf16.mxu0 0
      %833 = vmatpush1.bf16.msra.mxu0 %v715
      %834 = vmatprep.subr.bf16.mxu0 0
      %835 = vmatpush1.bf16.msra.mxu0 %v716
      %836 = vmatprep.subr.bf16.mxu0 0
      %837 = vmatpush1.bf16.msra.mxu0 %v717
      %838 = vmatprep.subr.bf16.mxu0 0
      %839 = vmatpush1.bf16.msra.mxu0 %v824
      %840 = vmatprep.subr.bf16.mxu0 0
      %841 = vmatpush1.bf16.msra.mxu0 0
      %842 = vmatprep.subr.bf16.mxu0 0
      %843 = vmatpush1.bf16.msra.mxu0 0
      %844 = vmatprep.subr.bf16.mxu0 0
      %845 = vmatpush1.bf16.msra.mxu0 0
      %846 = vmatprep.subr.bf16.mxu0 0
      %847 = vmatpush1.bf16.msra.mxu0 0
      %848 = vmatprep.subr.bf16.mxu0 0
      %849 = vmatpush1.bf16.msra.mxu0 0
      %850 = vmatprep.subr.bf16.mxu0 0
      %851 = vmatpush1.bf16.msra.mxu0 0
      %852 = vmatprep.subr.bf16.mxu0 0
      %853 = vmatpush1.bf16.msra.mxu0 0
      %854 = vmatprep.subr.bf16.mxu0 0
      %855 = vmatpush1.bf16.msra.mxu0 0
      %856 = vmatprep.subr.bf16.mxu0 0
      %857 = vmatpush1.bf16.msra.mxu0 0
      %858 = vmatprep.mubr.bf16.mxu0 0
      %859 = vmatmul.mubr.bf16.gmra.mrb[0].mxu0 %v727
      %v860 = vpop.f32.mrb[0].mxu0
      %v861 = vadd.f32 0.0, %v860
      %v862 = vpop.f32.mrb[0].mxu0
      %v863 = vpop.f32.mrb[0].mxu0
      %v864 = vadd.f32 0.0, %v863
      %v865 = vpop.f32.mrb[0].mxu0
      %866 = vmatprep.mubr.bf16.mxu0 0
      %867 = vmatmul.mubr.bf16.gmra.mrb[0].mxu0 %v730
      %v868 = vpop.f32.mrb[0].mxu0
      %v869 = vadd.f32 0.0, %v868
      %v870 = vpop.f32.mrb[0].mxu0
      %v871 = vpop.f32.mrb[0].mxu0
      %v872 = vadd.f32 0.0, %v871
      %v873 = vpop.f32.mrb[0].mxu0
      %874 = vmatprep.mubr.bf16.mxu0 0
      %875 = vmatmul.mubr.bf16.gmra.mrb[0].mxu0 %v733
      %v876 = vpop.f32.mrb[0].mxu0
      %v877 = vadd.f32 0.0, %v876
      %v878 = vpop.f32.mrb[0].mxu0
      %v879 = vpop.f32.mrb[0].mxu0
      %v880 = vadd.f32 0.0, %v879
      %v881 = vpop.f32.mrb[0].mxu0
      %882 = vmatprep.mubr.bf16.mxu0 0
      %883 = vmatmul.mubr.bf16.gmra.mrb[0].mxu0 %v736
      %v884 = vpop.f32.mrb[0].mxu0
      %v885 = vadd.f32 0.0, %v884
      %v886 = vpop.f32.mrb[0].mxu0
      %v887 = vpop.f32.mrb[0].mxu0
      %v888 = vadd.f32 0.0, %v887
      %v889 = vpop.f32.mrb[0].mxu0
      %890 = vmatprep.mubr.bf16.mxu0 0
      %891 = vmatmul.mubr.bf16.gmra.mrb[0].mxu0 %v739
      %v892 = vpop.f32.mrb[0].mxu0
      %v893 = vadd.f32 0.0, %v892
      %v894 = vpop.f32.mrb[0].mxu0
      %v895 = vpop.f32.mrb[0].mxu0
      %v896 = vadd.f32 0.0, %v895
      %v897 = vpop.f32.mrb[0].mxu0
      %898 = vmatprep.mubr.bf16.mxu0 0
      %899 = vmatmul.mubr.bf16.gmra.mrb[0].mxu0 %v742
      %v900 = vpop.f32.mrb[0].mxu0
      %v901 = vadd.f32 0.0, %v900
      %v902 = vpop.f32.mrb[0].mxu0
      %v903 = vpop.f32.mrb[0].mxu0
      %v904 = vadd.f32 0.0, %v903
      %v905 = vpop.f32.mrb[0].mxu0
      %906 = vmatprep.mubr.bf16.mxu0 0
      %907 = vmatmul.mubr.bf16.gmra.mrb[0].mxu0 %v745
      %v908 = vpop.f32.mrb[0].mxu0
      %v909 = vadd.f32 0.0, %v908
      %v910 = vpop.f32.mrb[0].mxu0
      %v911 = vpop.f32.mrb[0].mxu0
      %v912 = vadd.f32 0.0, %v911
      %v913 = vpop.f32.mrb[0].mxu0
      %914 = vmatprep.mubr.bf16.mxu0 0
      %915 = vmatmul.mubr.bf16.gmra.mrb[0].mxu0 %v748
      %v916 = vpop.f32.mrb[0].mxu0
      %v917 = vadd.f32 0.0, %v916
      %v918 = vpop.f32.mrb[0].mxu0
      %v919 = vpop.f32.mrb[0].mxu0
      %v920 = vadd.f32 0.0, %v919
      %v921 = vpop.f32.mrb[0].mxu0
      %922 = vmatprep.mubr.bf16.mxu0 0
      %923 = vmatmul.mubr.bf16.gmra.mrb[0].mxu0 %v751
      %v924 = vpop.f32.mrb[0].mxu0
      %v925 = vadd.f32 0.0, %v924
      %v926 = vpop.f32.mrb[0].mxu0
      %v927 = vpop.f32.mrb[0].mxu0
      %v928 = vadd.f32 0.0, %v927
      %v929 = vpop.f32.mrb[0].mxu0
      %930 = vmatprep.mubr.bf16.mxu0 0
      %931 = vmatmul.mubr.bf16.gmra.mrb[0].mxu0 %v754
      %v932 = vpop.f32.mrb[0].mxu0
      %v933 = vadd.f32 0.0, %v932
      %v934 = vpop.f32.mrb[0].mxu0
      %v935 = vpop.f32.mrb[0].mxu0
      %v936 = vadd.f32 0.0, %v935
      %v937 = vpop.f32.mrb[0].mxu0
      %938 = vmatprep.mubr.bf16.mxu0 0
      %939 = vmatmul.mubr.bf16.gmra.mrb[0].mxu0 %v757
      %v940 = vpop.f32.mrb[0].mxu0
      %v941 = vadd.f32 0.0, %v940
      %v942 = vpop.f32.mrb[0].mxu0
      %v943 = vpop.f32.mrb[0].mxu0
      %v944 = vadd.f32 0.0, %v943
      %v945 = vpop.f32.mrb[0].mxu0
      %946 = vmatprep.mubr.bf16.mxu0 0
      %947 = vmatmul.mubr.bf16.gmra.mrb[0].mxu0 %v760
      %v948 = vpop.f32.mrb[0].mxu0
      %v949 = vadd.f32 0.0, %v948
      %v950 = vpop.f32.mrb[0].mxu0
      %v951 = vpop.f32.mrb[0].mxu0
      %v952 = vadd.f32 0.0, %v951
      %v953 = vpop.f32.mrb[0].mxu0
      %954 = vmatprep.mubr.bf16.mxu0 0
      %955 = vmatmul.mubr.bf16.gmra.mrb[0].mxu0 %v763
      %v956 = vpop.f32.mrb[0].mxu0
      %v957 = vadd.f32 0.0, %v956
      %v958 = vpop.f32.mrb[0].mxu0
      %v959 = vpop.f32.mrb[0].mxu0
      %v960 = vadd.f32 0.0, %v959
      %v961 = vpop.f32.mrb[0].mxu0
      %962 = vmatprep.mubr.bf16.mxu0 0
      %963 = vmatmul.mubr.bf16.gmra.mrb[0].mxu0 %v766
      %v964 = vpop.f32.mrb[0].mxu0
      %v965 = vadd.f32 0.0, %v964
      %v966 = vpop.f32.mrb[0].mxu0
      %v967 = vpop.f32.mrb[0].mxu0
      %v968 = vadd.f32 0.0, %v967
      %v969 = vpop.f32.mrb[0].mxu0
      %970 = vmatprep.mubr.bf16.mxu0 0
      %971 = vmatmul.mubr.bf16.gmra.mrb[0].mxu0 %v769
      %v972 = vpop.f32.mrb[0].mxu0
      %v973 = vadd.f32 0.0, %v972
      %v974 = vpop.f32.mrb[0].mxu0
      %v975 = vpop.f32.mrb[0].mxu0
      %v976 = vadd.f32 0.0, %v975
      %v977 = vpop.f32.mrb[0].mxu0
      %978 = vmatprep.mubr.bf16.mxu0 0
      %979 = vmatmul.mubr.bf16.gmra.mrb[0].mxu0 %v772
      %v980 = vpop.f32.mrb[0].mxu0
      %v981 = vadd.f32 0.0, %v980
      %v982 = vpop.f32.mrb[0].mxu0
      %v983 = vpop.f32.mrb[0].mxu0
      %v984 = vadd.f32 0.0, %v983
      %v985 = vpop.f32.mrb[0].mxu0
      %986 = vmatprep.mubr.bf16.mxu0 0
      %987 = vmatmul.mubr.bf16.gmra.mrb[0].mxu0 %v775
      %v988 = vpop.f32.mrb[0].mxu0
      %v989 = vadd.f32 0.0, %v988
      %v990 = vpop.f32.mrb[0].mxu0
      %v991 = vpop.f32.mrb[0].mxu0
      %v992 = vadd.f32 0.0, %v991
      %v993 = vpop.f32.mrb[0].mxu0
      %994 = vmatprep.mubr.bf16.mxu0 0
      %995 = vmatmul.mubr.bf16.gmra.mrb[0].mxu0 %v778
      %v996 = vpop.f32.mrb[0].mxu0
      %v997 = vadd.f32 0.0, %v996
      %v998 = vpop.f32.mrb[0].mxu0
      %v999 = vpop.f32.mrb[0].mxu0
      %v1000 = vadd.f32 0.0, %v999
      %v1001 = vpop.f32.mrb[0].mxu0
      %1002 = vmatprep.mubr.bf16.mxu0 0
      %1003 = vmatmul.mubr.bf16.gmra.mrb[0].mxu0 %v781
      %v1004 = vpop.f32.mrb[0].mxu0
      %v1005 = vadd.f32 0.0, %v1004
      %v1006 = vpop.f32.mrb[0].mxu0
      %v1007 = vpop.f32.mrb[0].mxu0
      %v1008 = vadd.f32 0.0, %v1007
      %v1009 = vpop.f32.mrb[0].mxu0
      %1010 = vmatprep.mubr.bf16.mxu0 0
      %1011 = vmatmul.mubr.bf16.gmra.mrb[0].mxu0 %v784
      %v1012 = vpop.f32.mrb[0].mxu0
      %v1013 = vadd.f32 0.0, %v1012
      %v1014 = vpop.f32.mrb[0].mxu0
      %v1015 = vpop.f32.mrb[0].mxu0
      %v1016 = vadd.f32 0.0, %v1015
      %v1017 = vpop.f32.mrb[0].mxu0
      %1018 = vmatprep.mubr.bf16.mxu0 0
      %1019 = vmatmul.mubr.bf16.gmra.mrb[0].mxu0 %v787
      %v1020 = vpop.f32.mrb[0].mxu0
      %v1021 = vadd.f32 0.0, %v1020
      %v1022 = vpop.f32.mrb[0].mxu0
      %v1023 = vpop.f32.mrb[0].mxu0
      %v1024 = vadd.f32 0.0, %v1023
      %v1025 = vpop.f32.mrb[0].mxu0
      %1026 = vmatprep.mubr.bf16.mxu0 0
      %1027 = vmatmul.mubr.bf16.gmra.mrb[0].mxu0 %v790
      %v1028 = vpop.f32.mrb[0].mxu0
      %v1029 = vadd.f32 0.0, %v1028
      %v1030 = vpop.f32.mrb[0].mxu0
      %v1031 = vpop.f32.mrb[0].mxu0
      %v1032 = vadd.f32 0.0, %v1031
      %v1033 = vpop.f32.mrb[0].mxu0
      %1034 = vmatprep.mubr.bf16.mxu0 0
      %1035 = vmatmul.mubr.bf16.gmra.mrb[0].mxu0 %v793
      %v1036 = vpop.f32.mrb[0].mxu0
      %v1037 = vadd.f32 0.0, %v1036
      %v1038 = vpop.f32.mrb[0].mxu0
      %v1039 = vpop.f32.mrb[0].mxu0
      %v1040 = vadd.f32 0.0, %v1039
      %v1041 = vpop.f32.mrb[0].mxu0
      %1042 = vmatprep.mubr.bf16.mxu0 0
      %1043 = vmatmul.mubr.bf16.gmra.mrb[0].mxu0 %v796
      %v1044 = vpop.f32.mrb[0].mxu0
      %v1045 = vadd.f32 0.0, %v1044
      %v1046 = vpop.f32.mrb[0].mxu0
      %v1047 = vpop.f32.mrb[0].mxu0
      %v1048 = vadd.f32 0.0, %v1047
      %v1049 = vpop.f32.mrb[0].mxu0
      %1050 = vmatprep.mubr.bf16.mxu0 0
      %1051 = vmatmul.mubr.bf16.gmra.mrb[0].mxu0 %v799
      %v1052 = vpop.f32.mrb[0].mxu0
      %v1053 = vadd.f32 0.0, %v1052
      %v1054 = vpop.f32.mrb[0].mxu0
      %v1055 = vpop.f32.mrb[0].mxu0
      %v1056 = vadd.f32 0.0, %v1055
      %v1057 = vpop.f32.mrb[0].mxu0
      %1058 = vmatprep.mubr.bf16.mxu0 0
      %1059 = vmatmul.mubr.bf16.gmra.mrb[0].mxu0 %v802
      %v1060 = vpop.f32.mrb[0].mxu0
      %v1061 = vadd.f32 0.0, %v1060
      %v1062 = vpop.f32.mrb[0].mxu0
      %v1063 = vpop.f32.mrb[0].mxu0
      %v1064 = vadd.f32 0.0, %v1063
      %v1065 = vpop.f32.mrb[0].mxu0
      %1066 = vmatprep.mubr.bf16.mxu0 0
      %1067 = vmatmul.mubr.bf16.gmra.mrb[0].mxu0 %v805
      %v1068 = vpop.f32.mrb[0].mxu0
      %v1069 = vadd.f32 0.0, %v1068
      %v1070 = vpop.f32.mrb[0].mxu0
      %v1071 = vpop.f32.mrb[0].mxu0
      %v1072 = vadd.f32 0.0, %v1071
      %v1073 = vpop.f32.mrb[0].mxu0
      %1074 = vmatprep.mubr.bf16.mxu0 0
      %1075 = vmatmul.mubr.bf16.gmra.mrb[0].mxu0 %v808
      %v1076 = vpop.f32.mrb[0].mxu0
      %v1077 = vadd.f32 0.0, %v1076
      %v1078 = vpop.f32.mrb[0].mxu0
      %v1079 = vpop.f32.mrb[0].mxu0
      %v1080 = vadd.f32 0.0, %v1079
      %v1081 = vpop.f32.mrb[0].mxu0
      %1082 = vmatprep.mubr.bf16.mxu0 0
      %1083 = vmatmul.mubr.bf16.gmra.mrb[0].mxu0 %v811
      %v1084 = vpop.f32.mrb[0].mxu0
      %v1085 = vadd.f32 0.0, %v1084
      %v1086 = vpop.f32.mrb[0].mxu0
      %v1087 = vpop.f32.mrb[0].mxu0
      %v1088 = vadd.f32 0.0, %v1087
      %v1089 = vpop.f32.mrb[0].mxu0
      %1090 = vmatprep.mubr.bf16.mxu0 0
      %1091 = vmatmul.mubr.bf16.gmra.mrb[0].mxu0 %v814
      %v1092 = vpop.f32.mrb[0].mxu0
      %v1093 = vadd.f32 0.0, %v1092
      %v1094 = vpop.f32.mrb[0].mxu0
      %v1095 = vpop.f32.mrb[0].mxu0
      %v1096 = vadd.f32 0.0, %v1095
      %v1097 = vpop.f32.mrb[0].mxu0
      %1098 = vmatprep.mubr.bf16.mxu0 0
      %1099 = vmatmul.mubr.bf16.gmra.mrb[0].mxu0 %v817
      %v1100 = vpop.f32.mrb[0].mxu0
      %v1101 = vadd.f32 0.0, %v1100
      %v1102 = vpop.f32.mrb[0].mxu0
      %v1103 = vpop.f32.mrb[0].mxu0
      %v1104 = vadd.f32 0.0, %v1103
      %v1105 = vpop.f32.mrb[0].mxu0
      %1106 = vmatprep.mubr.bf16.mxu0 0
      %1107 = vmatmul.mubr.bf16.gmra.mrb[0].mxu0 %v820
      %v1108 = vpop.f32.mrb[0].mxu0
      %v1109 = vadd.f32 0.0, %v1108
      %v1110 = vpop.f32.mrb[0].mxu0
      %v1111 = vpop.f32.mrb[0].mxu0
      %v1112 = vadd.f32 0.0, %v1111
      %v1113 = vpop.f32.mrb[0].mxu0
      %1114 = vdwg.mxu0
      %v1115 = vadd.f32 %v382, %v861
      %v1116 = vadd.f32 %v383, %v864
      %v1117 = vadd.f32 %v384, %v869
      %v1118 = vadd.f32 %v385, %v872
      %v1119 = vadd.f32 %v386, %v877
      %v1120 = vadd.f32 %v387, %v880
      %v1121 = vadd.f32 %v388, %v885
      %v1122 = vadd.f32 %v389, %v888
      %v1123 = vadd.f32 %v390, %v893
      %v1124 = vadd.f32 %v391, %v896
      %v1125 = vadd.f32 %v392, %v901
      %v1126 = vadd.f32 %v393, %v904
      %v1127 = vadd.f32 %v394, %v909
      %v1128 = vadd.f32 %v395, %v912
      %v1129 = vadd.f32 %v396, %v917
      %v1130 = vadd.f32 %v397, %v920
      %v1131 = vadd.f32 %v398, %v925
      %v1132 = vadd.f32 %v399, %v928
      %v1133 = vadd.f32 %v400, %v933
      %v1134 = vadd.f32 %v401, %v936
      %v1135 = vadd.f32 %v402, %v941
      %v1136 = vadd.f32 %v403, %v944
      %v1137 = vadd.f32 %v404, %v949
      %v1138 = vadd.f32 %v405, %v952
      %v1139 = vadd.f32 %v406, %v957
      %v1140 = vadd.f32 %v407, %v960
      %v1141 = vadd.f32 %v408, %v965
      %v1142 = vadd.f32 %v409, %v968
      %v1143 = vadd.f32 %v410, %v973
      %v1144 = vadd.f32 %v411, %v976
      %v1145 = vadd.f32 %v412, %v981
      %v1146 = vadd.f32 %v413, %v984
      %v1147 = vadd.f32 %v414, %v989
      %v1148 = vadd.f32 %v415, %v992
      %v1149 = vadd.f32 %v416, %v997
      %v1150 = vadd.f32 %v417, %v1000
      %v1151 = vadd.f32 %v418, %v1005
      %v1152 = vadd.f32 %v419, %v1008
      %v1153 = vadd.f32 %v420, %v1013
      %v1154 = vadd.f32 %v421, %v1016
      %v1155 = vadd.f32 %v422, %v1021
      %v1156 = vadd.f32 %v423, %v1024
      %v1157 = vadd.f32 %v424, %v1029
      %v1158 = vadd.f32 %v425, %v1032
      %v1159 = vadd.f32 %v426, %v1037
      %v1160 = vadd.f32 %v427, %v1040
      %v1161 = vadd.f32 %v428, %v1045
      %v1162 = vadd.f32 %v429, %v1048
      %v1163 = vadd.f32 %v430, %v1053
      %v1164 = vadd.f32 %v431, %v1056
      %v1165 = vadd.f32 %v432, %v1061
      %v1166 = vadd.f32 %v433, %v1064
      %v1167 = vadd.f32 %v434, %v1069
      %v1168 = vadd.f32 %v435, %v1072
      %v1169 = vadd.f32 %v436, %v1077
      %v1170 = vadd.f32 %v437, %v1080
      %v1171 = vadd.f32 %v438, %v1085
      %v1172 = vadd.f32 %v439, %v1088
      %v1173 = vadd.f32 %v440, %v1093
      %v1174 = vadd.f32 %v441, %v1096
      %v1175 = vadd.f32 %v442, %v1101
      %v1176 = vadd.f32 %v443, %v1104
      %v1177 = vadd.f32 %v444, %v1109
      %v1178 = vadd.f32 %v445, %v1112
      %vm1179 = vcmask 64512
      %1180 = vst.msk [vmem:[#allocation2] sm:$0xff] %vm1179, %v1115
      %1181 = vst.msk [vmem:[#allocation2 + $0x8] sm:$0xff] %vm1179, %v1116
      %1182 = vst.msk [vmem:[#allocation2 + $0x10] sm:$0xff] %vm1179, %v1117
      %1183 = vst.msk [vmem:[#allocation2 + $0x18] sm:$0xff] %vm1179, %v1118
      %1184 = vst.msk [vmem:[#allocation2 + $0x20] sm:$0xff] %vm1179, %v1119
      %1185 = vst.msk [vmem:[#allocation2 + $0x28] sm:$0xff] %vm1179, %v1120
      %1186 = vst.msk [vmem:[#allocation2 + $0x30] sm:$0xff] %vm1179, %v1121
      %1187 = vst.msk [vmem:[#allocation2 + $0x38] sm:$0xff] %vm1179, %v1122
      %1188 = vst.msk [vmem:[#allocation2 + $0x40] sm:$0xff] %vm1179, %v1123
      %1189 = vst.msk [vmem:[#allocation2 + $0x48] sm:$0xff] %vm1179, %v1124
      %1190 = vst.msk [vmem:[#allocation2 + $0x50] sm:$0xff] %vm1179, %v1125
      %1191 = vst.msk [vmem:[#allocation2 + $0x58] sm:$0xff] %vm1179, %v1126
      %1192 = vst.msk [vmem:[#allocation2 + $0x60] sm:$0xff] %vm1179, %v1127
      %1193 = vst.msk [vmem:[#allocation2 + $0x68] sm:$0xff] %vm1179, %v1128
      %1194 = vst.msk [vmem:[#allocation2 + $0x70] sm:$0xff] %vm1179, %v1129
      %1195 = vst.msk [vmem:[#allocation2 + $0x78] sm:$0xff] %vm1179, %v1130
      %1196 = vst.msk [vmem:[#allocation2 + $0x80] sm:$0xff] %vm1179, %v1131
      %1197 = vst.msk [vmem:[#allocation2 + $0x88] sm:$0xff] %vm1179, %v1132
      %1198 = vst.msk [vmem:[#allocation2 + $0x90] sm:$0xff] %vm1179, %v1133
      %1199 = vst.msk [vmem:[#allocation2 + $0x98] sm:$0xff] %vm1179, %v1134
      %1200 = vst.msk [vmem:[#allocation2 + $0xa0] sm:$0xff] %vm1179, %v1135
      %1201 = vst.msk [vmem:[#allocation2 + $0xa8] sm:$0xff] %vm1179, %v1136
      %1202 = vst.msk [vmem:[#allocation2 + $0xb0] sm:$0xff] %vm1179, %v1137
      %1203 = vst.msk [vmem:[#allocation2 + $0xb8] sm:$0xff] %vm1179, %v1138
      %1204 = vst.msk [vmem:[#allocation2 + $0xc0] sm:$0xff] %vm1179, %v1139
      %1205 = vst.msk [vmem:[#allocation2 + $0xc8] sm:$0xff] %vm1179, %v1140
      %1206 = vst.msk [vmem:[#allocation2 + $0xd0] sm:$0xff] %vm1179, %v1141
      %1207 = vst.msk [vmem:[#allocation2 + $0xd8] sm:$0xff] %vm1179, %v1142
      %1208 = vst.msk [vmem:[#allocation2 + $0xe0] sm:$0xff] %vm1179, %v1143
      %1209 = vst.msk [vmem:[#allocation2 + $0xe8] sm:$0xff] %vm1179, %v1144
      %1210 = vst.msk [vmem:[#allocation2 + $0xf0] sm:$0xff] %vm1179, %v1145
      %1211 = vst.msk [vmem:[#allocation2 + $0xf8] sm:$0xff] %vm1179, %v1146
      %1212 = vst.msk [vmem:[#allocation2 + $0x100] sm:$0xff] %vm1179, %v1147
      %1213 = vst.msk [vmem:[#allocation2 + $0x108] sm:$0xff] %vm1179, %v1148
      %1214 = vst.msk [vmem:[#allocation2 + $0x110] sm:$0xff] %vm1179, %v1149
      %1215 = vst.msk [vmem:[#allocation2 + $0x118] sm:$0xff] %vm1179, %v1150
      %1216 = vst.msk [vmem:[#allocation2 + $0x120] sm:$0xff] %vm1179, %v1151
      %1217 = vst.msk [vmem:[#allocation2 + $0x128] sm:$0xff] %vm1179, %v1152
      %1218 = vst.msk [vmem:[#allocation2 + $0x130] sm:$0xff] %vm1179, %v1153
      %1219 = vst.msk [vmem:[#allocation2 + $0x138] sm:$0xff] %vm1179, %v1154
      %1220 = vst.msk [vmem:[#allocation2 + $0x140] sm:$0xff] %vm1179, %v1155
      %1221 = vst.msk [vmem:[#allocation2 + $0x148] sm:$0xff] %vm1179, %v1156
      %1222 = vst.msk [vmem:[#allocation2 + $0x150] sm:$0xff] %vm1179, %v1157
      %1223 = vst.msk [vmem:[#allocation2 + $0x158] sm:$0xff] %vm1179, %v1158
      %1224 = vst.msk [vmem:[#allocation2 + $0x160] sm:$0xff] %vm1179, %v1159
      %1225 = vst.msk [vmem:[#allocation2 + $0x168] sm:$0xff] %vm1179, %v1160
      %1226 = vst.msk [vmem:[#allocation2 + $0x170] sm:$0xff] %vm1179, %v1161
      %1227 = vst.msk [vmem:[#allocation2 + $0x178] sm:$0xff] %vm1179, %v1162
      %1228 = vst.msk [vmem:[#allocation2 + $0x180] sm:$0xff] %vm1179, %v1163
      %1229 = vst.msk [vmem:[#allocation2 + $0x188] sm:$0xff] %vm1179, %v1164
      %1230 = vst.msk [vmem:[#allocation2 + $0x190] sm:$0xff] %vm1179, %v1165
      %1231 = vst.msk [vmem:[#allocation2 + $0x198] sm:$0xff] %vm1179, %v1166
      %1232 = vst.msk [vmem:[#allocation2 + $0x1a0] sm:$0xff] %vm1179, %v1167
      %1233 = vst.msk [vmem:[#allocation2 + $0x1a8] sm:$0xff] %vm1179, %v1168
      %1234 = vst.msk [vmem:[#allocation2 + $0x1b0] sm:$0xff] %vm1179, %v1169
      %1235 = vst.msk [vmem:[#allocation2 + $0x1b8] sm:$0xff] %vm1179, %v1170
      %1236 = vst.msk [vmem:[#allocation2 + $0x1c0] sm:$0xff] %vm1179, %v1171
      %1237 = vst.msk [vmem:[#allocation2 + $0x1c8] sm:$0xff] %vm1179, %v1172
      %1238 = vst.msk [vmem:[#allocation2 + $0x1d0] sm:$0xff] %vm1179, %v1173
      %1239 = vst.msk [vmem:[#allocation2 + $0x1d8] sm:$0xff] %vm1179, %v1174
      %1240 = vst.msk [vmem:[#allocation2 + $0x1e0] sm:$0xff] %vm1179, %v1175
      %1241 = vst.msk [vmem:[#allocation2 + $0x1e8] sm:$0xff] %vm1179, %v1176
      %1242 = vst.msk [vmem:[#allocation2 + $0x1f0] sm:$0xff] %vm1179, %v1177
      %1243 = vst.msk [vmem:[#allocation2 + $0x1f8] sm:$0xff] %vm1179, %v1178
      // Predicated region
      $region37: #{deform_conv3d_forward.1} parent=31 // pred_check
        %p1244 = pneg %p313
      $region38: #{deform_conv3d_forward.1} parent=31 // pred_check_branch
        %1246 = sbr.rel (%p1244) target = $region40
      $region39: #{deform_conv3d_forward.1} parent=31 // pred_region
        %v1247 = vld [vmem:[#allocation2] sm:$0xff]
        %v1248 = vld [vmem:[#allocation2 + $0x8] sm:$0xff]
        %v1249 = vld [vmem:[#allocation2 + $0x10] sm:$0xff]
        %v1250 = vld [vmem:[#allocation2 + $0x18] sm:$0xff]
        %v1251 = vld [vmem:[#allocation2 + $0x20] sm:$0xff]
        %v1252 = vld [vmem:[#allocation2 + $0x28] sm:$0xff]
        %v1253 = vld [vmem:[#allocation2 + $0x30] sm:$0xff]
        %v1254 = vld [vmem:[#allocation2 + $0x38] sm:$0xff]
        %v1255 = vld [vmem:[#allocation2 + $0x40] sm:$0xff]
        %v1256 = vld [vmem:[#allocation2 + $0x48] sm:$0xff]
        %v1257 = vld [vmem:[#allocation2 + $0x50] sm:$0xff]
        %v1258 = vld [vmem:[#allocation2 + $0x58] sm:$0xff]
        %v1259 = vld [vmem:[#allocation2 + $0x60] sm:$0xff]
        %v1260 = vld [vmem:[#allocation2 + $0x68] sm:$0xff]
        %v1261 = vld [vmem:[#allocation2 + $0x70] sm:$0xff]
        %v1262 = vld [vmem:[#allocation2 + $0x78] sm:$0xff]
        %v1263 = vld [vmem:[#allocation2 + $0x80] sm:$0xff]
        %v1264 = vld [vmem:[#allocation2 + $0x88] sm:$0xff]
        %v1265 = vld [vmem:[#allocation2 + $0x90] sm:$0xff]
        %v1266 = vld [vmem:[#allocation2 + $0x98] sm:$0xff]
        %v1267 = vld [vmem:[#allocation2 + $0xa0] sm:$0xff]
        %v1268 = vld [vmem:[#allocation2 + $0xa8] sm:$0xff]
        %v1269 = vld [vmem:[#allocation2 + $0xb0] sm:$0xff]
        %v1270 = vld [vmem:[#allocation2 + $0xb8] sm:$0xff]
        %v1271 = vld [vmem:[#allocation2 + $0xc0] sm:$0xff]
        %v1272 = vld [vmem:[#allocation2 + $0xc8] sm:$0xff]
        %v1273 = vld [vmem:[#allocation2 + $0xd0] sm:$0xff]
        %v1274 = vld [vmem:[#allocation2 + $0xd8] sm:$0xff]
        %v1275 = vld [vmem:[#allocation2 + $0xe0] sm:$0xff]
        %v1276 = vld [vmem:[#allocation2 + $0xe8] sm:$0xff]
        %v1277 = vld [vmem:[#allocation2 + $0xf0] sm:$0xff]
        %v1278 = vld [vmem:[#allocation2 + $0xf8] sm:$0xff]
        %v1279 = vld [vmem:[#allocation2 + $0x100] sm:$0xff]
        %v1280 = vld [vmem:[#allocation2 + $0x108] sm:$0xff]
        %v1281 = vld [vmem:[#allocation2 + $0x110] sm:$0xff]
        %v1282 = vld [vmem:[#allocation2 + $0x118] sm:$0xff]
        %v1283 = vld [vmem:[#allocation2 + $0x120] sm:$0xff]
        %v1284 = vld [vmem:[#allocation2 + $0x128] sm:$0xff]
        %v1285 = vld [vmem:[#allocation2 + $0x130] sm:$0xff]
        %v1286 = vld [vmem:[#allocation2 + $0x138] sm:$0xff]
        %v1287 = vld [vmem:[#allocation2 + $0x140] sm:$0xff]
        %v1288 = vld [vmem:[#allocation2 + $0x148] sm:$0xff]
        %v1289 = vld [vmem:[#allocation2 + $0x150] sm:$0xff]
        %v1290 = vld [vmem:[#allocation2 + $0x158] sm:$0xff]
        %v1291 = vld [vmem:[#allocation2 + $0x160] sm:$0xff]
        %v1292 = vld [vmem:[#allocation2 + $0x168] sm:$0xff]
        %v1293 = vld [vmem:[#allocation2 + $0x170] sm:$0xff]
        %v1294 = vld [vmem:[#allocation2 + $0x178] sm:$0xff]
        %v1295 = vld [vmem:[#allocation2 + $0x180] sm:$0xff]
        %v1296 = vld [vmem:[#allocation2 + $0x188] sm:$0xff]
        %v1297 = vld [vmem:[#allocation2 + $0x190] sm:$0xff]
        %v1298 = vld [vmem:[#allocation2 + $0x198] sm:$0xff]
        %v1299 = vld [vmem:[#allocation2 + $0x1a0] sm:$0xff]
        %v1300 = vld [vmem:[#allocation2 + $0x1a8] sm:$0xff]
        %v1301 = vld [vmem:[#allocation2 + $0x1b0] sm:$0xff]
        %v1302 = vld [vmem:[#allocation2 + $0x1b8] sm:$0xff]
        %v1303 = vld [vmem:[#allocation2 + $0x1c0] sm:$0xff]
        %v1304 = vld [vmem:[#allocation2 + $0x1c8] sm:$0xff]
        %v1305 = vld [vmem:[#allocation2 + $0x1d0] sm:$0xff]
        %v1306 = vld [vmem:[#allocation2 + $0x1d8] sm:$0xff]
        %v1307 = vld [vmem:[#allocation2 + $0x1e0] sm:$0xff]
        %v1308 = vld [vmem:[#allocation2 + $0x1e8] sm:$0xff]
        %v1309 = vld [vmem:[#allocation2 + $0x1f0] sm:$0xff]
        %v1310 = vld [vmem:[#allocation2 + $0x1f8] sm:$0xff]
        %1311 = vxpose.xlu0.b32.start [1/16] %v1247, 128
        %1312 = vxpose.xlu0.b32.cont [2/16] %v1248, 128
        %1313 = vxpose.xlu0.b32.cont [3/16] %v1249, 128
        %1314 = vxpose.xlu0.b32.cont [4/16] %v1250, 128
        %1315 = vxpose.xlu0.b32.cont [5/16] %v1251, 128
        %1316 = vxpose.xlu0.b32.cont [6/16] %v1252, 128
        %1317 = vxpose.xlu0.b32.cont [7/16] %v1253, 128
        %1318 = vxpose.xlu0.b32.cont [8/16] %v1254, 128
        %1319 = vxpose.xlu0.b32.cont [9/16] %v1255, 128
        %1320 = vxpose.xlu0.b32.cont [10/16] %v1256, 128
        %1321 = vxpose.xlu0.b32.cont [11/16] %v1257, 128
        %1322 = vxpose.xlu0.b32.cont [12/16] %v1258, 128
        %1323 = vxpose.xlu0.b32.cont [13/16] %v1259, 128
        %1324 = vxpose.xlu0.b32.cont [14/16] %v1260, 128
        %1325 = vxpose.xlu0.b32.cont [15/16] %v1261, 128
        %1326 = vxpose.xlu0.b32.end [16/16] %v1262, 128
        %v1327 = vpop.trf.xlu0
        %v1328 = vpop.trf.xlu0
        %v1329 = vpop.trf.xlu0
        %v1330 = vpop.trf.xlu0
        %v1331 = vpop.trf.xlu0
        %v1332 = vpop.trf.xlu0
        %v1333 = vpop.trf.xlu0
        %v1334 = vpop.trf.xlu0
        %v1335 = vpop.trf.xlu0
        %v1336 = vpop.trf.xlu0
        %v1337 = vpop.trf.xlu0
        %v1338 = vpop.trf.xlu0
        %v1339 = vpop.trf.xlu0
        %v1340 = vpop.trf.xlu0
        %v1341 = vpop.trf.xlu0
        %v1342 = vpop.trf.xlu0
        %1343 = vxpose.xlu0.b32.start [1/16] %v1263, 128
        %1344 = vxpose.xlu0.b32.cont [2/16] %v1264, 128
        %1345 = vxpose.xlu0.b32.cont [3/16] %v1265, 128
        %1346 = vxpose.xlu0.b32.cont [4/16] %v1266, 128
        %1347 = vxpose.xlu0.b32.cont [5/16] %v1267, 128
        %1348 = vxpose.xlu0.b32.cont [6/16] %v1268, 128
        %1349 = vxpose.xlu0.b32.cont [7/16] %v1269, 128
        %1350 = vxpose.xlu0.b32.cont [8/16] %v1270, 128
        %1351 = vxpose.xlu0.b32.cont [9/16] %v1271, 128
        %1352 = vxpose.xlu0.b32.cont [10/16] %v1272, 128
        %1353 = vxpose.xlu0.b32.cont [11/16] %v1273, 128
        %1354 = vxpose.xlu0.b32.cont [12/16] %v1274, 128
        %1355 = vxpose.xlu0.b32.cont [13/16] %v1275, 128
        %1356 = vxpose.xlu0.b32.cont [14/16] %v1276, 128
        %1357 = vxpose.xlu0.b32.cont [15/16] %v1277, 128
        %1358 = vxpose.xlu0.b32.end [16/16] %v1278, 128
        %v1359 = vpop.trf.xlu0
        %v1360 = vpop.trf.xlu0
        %v1361 = vpop.trf.xlu0
        %v1362 = vpop.trf.xlu0
        %v1363 = vpop.trf.xlu0
        %v1364 = vpop.trf.xlu0
        %v1365 = vpop.trf.xlu0
        %v1366 = vpop.trf.xlu0
        %v1367 = vpop.trf.xlu0
        %v1368 = vpop.trf.xlu0
        %v1369 = vpop.trf.xlu0
        %v1370 = vpop.trf.xlu0
        %v1371 = vpop.trf.xlu0
        %v1372 = vpop.trf.xlu0
        %v1373 = vpop.trf.xlu0
        %v1374 = vpop.trf.xlu0
        %1375 = vxpose.xlu0.b32.start [1/16] %v1279, 128
        %1376 = vxpose.xlu0.b32.cont [2/16] %v1280, 128
        %1377 = vxpose.xlu0.b32.cont [3/16] %v1281, 128
        %1378 = vxpose.xlu0.b32.cont [4/16] %v1282, 128
        %1379 = vxpose.xlu0.b32.cont [5/16] %v1283, 128
        %1380 = vxpose.xlu0.b32.cont [6/16] %v1284, 128
        %1381 = vxpose.xlu0.b32.cont [7/16] %v1285, 128
        %1382 = vxpose.xlu0.b32.cont [8/16] %v1286, 128
        %1383 = vxpose.xlu0.b32.cont [9/16] %v1287, 128
        %1384 = vxpose.xlu0.b32.cont [10/16] %v1288, 128
        %1385 = vxpose.xlu0.b32.cont [11/16] %v1289, 128
        %1386 = vxpose.xlu0.b32.cont [12/16] %v1290, 128
        %1387 = vxpose.xlu0.b32.cont [13/16] %v1291, 128
        %1388 = vxpose.xlu0.b32.cont [14/16] %v1292, 128
        %1389 = vxpose.xlu0.b32.cont [15/16] %v1293, 128
        %1390 = vxpose.xlu0.b32.end [16/16] %v1294, 128
        %v1391 = vpop.trf.xlu0
        %v1392 = vpop.trf.xlu0
        %v1393 = vpop.trf.xlu0
        %v1394 = vpop.trf.xlu0
        %v1395 = vpop.trf.xlu0
        %v1396 = vpop.trf.xlu0
        %v1397 = vpop.trf.xlu0
        %v1398 = vpop.trf.xlu0
        %v1399 = vpop.trf.xlu0
        %v1400 = vpop.trf.xlu0
        %v1401 = vpop.trf.xlu0
        %v1402 = vpop.trf.xlu0
        %v1403 = vpop.trf.xlu0
        %v1404 = vpop.trf.xlu0
        %v1405 = vpop.trf.xlu0
        %v1406 = vpop.trf.xlu0
        %1407 = vxpose.xlu0.b32.start [1/16] %v1295, 128
        %1408 = vxpose.xlu0.b32.cont [2/16] %v1296, 128
        %1409 = vxpose.xlu0.b32.cont [3/16] %v1297, 128
        %1410 = vxpose.xlu0.b32.cont [4/16] %v1298, 128
        %1411 = vxpose.xlu0.b32.cont [5/16] %v1299, 128
        %1412 = vxpose.xlu0.b32.cont [6/16] %v1300, 128
        %1413 = vxpose.xlu0.b32.cont [7/16] %v1301, 128
        %1414 = vxpose.xlu0.b32.cont [8/16] %v1302, 128
        %1415 = vxpose.xlu0.b32.cont [9/16] %v1303, 128
        %1416 = vxpose.xlu0.b32.cont [10/16] %v1304, 128
        %1417 = vxpose.xlu0.b32.cont [11/16] %v1305, 128
        %1418 = vxpose.xlu0.b32.cont [12/16] %v1306, 128
        %1419 = vxpose.xlu0.b32.cont [13/16] %v1307, 128
        %1420 = vxpose.xlu0.b32.cont [14/16] %v1308, 128
        %1421 = vxpose.xlu0.b32.cont [15/16] %v1309, 128
        %1422 = vxpose.xlu0.b32.end [16/16] %v1310, 128
        %v1423 = vpop.trf.xlu0
        %v1424 = vpop.trf.xlu0
        %v1425 = vpop.trf.xlu0
        %v1426 = vpop.trf.xlu0
        %v1427 = vpop.trf.xlu0
        %v1428 = vpop.trf.xlu0
        %v1429 = vpop.trf.xlu0
        %v1430 = vpop.trf.xlu0
        %v1431 = vpop.trf.xlu0
        %v1432 = vpop.trf.xlu0
        %v1433 = vpop.trf.xlu0
        %v1434 = vpop.trf.xlu0
        %v1435 = vpop.trf.xlu0
        %v1436 = vpop.trf.xlu0
        %v1437 = vpop.trf.xlu0
        %v1438 = vpop.trf.xlu0
        %v1439 = vld [vmem:[%s280] sm:$0xff]
        %1441 = vset.pattern.permute.xlu0 0
        %1442 = vperm.xlu0 %1441, %v1439
        %v1443 = vpop.permute.xlu0 %1442
        %v1445 = vadd.f32 %v1327, %v1443
        %v1446 = vadd.f32 %v1359, %v1443
        %v1447 = vadd.f32 %v1391, %v1443
        %v1448 = vadd.f32 %v1423, %v1443
        %1449 = vst [vmem:[%s310] sm:$0xff] %v1445
        %1450 = vst [vmem:[%s310 + $0x8] sm:$0xff] %v1446
        %1451 = vst [vmem:[%s310 + $0x10] sm:$0xff] %v1447
        %1452 = vst [vmem:[%s310 + $0x18] sm:$0xff] %v1448
      $region40: #{deform_conv3d_forward.1} parent=31 // pred_fallthru
        _
      %s1453 = smul.u32 4, %s22
      %p1454 = scmp.lt.s32.totalorder %s20, 1
      %s1455 = scalar_select %p1454, %s20, 1
      %p1456 = scmp.lt.s32.totalorder %s21, 0
      %s1457 = scalar_select %p1456, %s21, 0
      %p1458 = scmp.lt.s32.totalorder %s1453, 3
      %s1459 = scalar_select %p1458, %s1453, 3
      %s1460 = smul.addr %s1457, 4
      %s1461 = sadd.s32 %s1459, %s1460
      %s1462 = smul.addr %s1455, 4
      %s1463 = sadd.s32 %s1461, %s1462
      %s1464 = smul.addr %s1463, 8
      %s1465 = scalar_lea.vmem %s3, %s1464
      // Predicated region
      $region41: #{deform_conv3d_forward.1} parent=31 // pred_check
        %p1466 = pneg %p148
      $region42: #{deform_conv3d_forward.1} parent=31 // pred_check_branch
        %1468 = sbr.rel (%p1466) target = $region44
      $region43: #{deform_conv3d_forward.1} parent=31 // pred_region
        %s1469 = smul.u32 4, %s22
      $region44: #{deform_conv3d_forward.1} parent=31 // pred_fallthru
        _
    $region32: #{deform_conv3d_forward.1} parent=5 // pred_fallthru
      _
    %p1470 = scmp.le.s32.totalorder 2, %s9
    // Predicated region
    $region45: #{deform_conv3d_forward.1} parent=5 // pred_check
      %p1471 = pneg %p1470
    $region46: #{deform_conv3d_forward.1} parent=5 // pred_check_branch
      %1473 = sbr.rel (%p1471) target = $region48
    $region47: #{deform_conv3d_forward.1} parent=5 // pred_region
      %s1474 = ssub.s32 %s9, 2
      // Predicated region
      $region49: #{deform_conv3d_forward.1} parent=47 // pred_check
        %p1475 = pneg %p154
      $region50: #{deform_conv3d_forward.1} parent=47 // pred_check_branch
        %1477 = sbr.rel (%p1475) target = $region52
      $region51: #{deform_conv3d_forward.1} parent=47 // pred_region
        %s1478 = smul.u32 4, %s26
        %p1479 = scmp.lt.s32.totalorder %s24, 1
        %s1480 = scalar_select %p1479, %s24, 1
        %p1481 = scmp.lt.s32.totalorder %s25, 0
        %s1482 = scalar_select %p1481, %s25, 0
        %p1483 = scmp.lt.s32.totalorder %s1478, 3
        %s1484 = scalar_select %p1483, %s1478, 3
        %s1485 = smul.addr %s1482, 4
        %s1486 = sadd.s32 %s1484, %s1485
        %s1487 = smul.addr %s1480, 4
        %s1488 = sadd.s32 %s1486, %s1487
        %s1489 = smul.addr %s1488, 8
        %s1490 = scalar_lea.vmem %s3, %s1489
      $region52: #{deform_conv3d_forward.1} parent=47 // pred_fallthru
        _
    $region48: #{deform_conv3d_forward.1} parent=5 // pred_fallthru
      _
  $region6: #{deform_conv3d_forward.1} parent=0 // loop_footer
    %s13 = sadd.s32 1, %s9
  $region7: #{deform_conv3d_forward.1} parent=0 // loop_footer_branch
    %8 = sbr.rel target = $region3
  $region8: #{deform_conv3d_forward.1} parent=0 // loop_exit
    _

</llo_original>
